<compile_context>
chip_gen: v5e
topology: v5e:2x2
jax: 0.10.0
libtpu: 0.0.40
codegen_flags: <defaults>
</compile_context>

<pallas_src>
import jax
import jax.numpy as jnp
from jax import lax
from jax.experimental import pallas as pl
from jax.experimental.pallas import tpu as pltpu


def _bilstm_kernel(words_ref, emb_tbl_ref, w_ih_ref, w_hh_ref, b_ref,
                   w_out_ref, b_out_ref, out_ref, emb2_buf, x_buf, h_buf):
    L = x_buf.shape[0]
    G = x_buf.shape[1]            # 8H  (4 gates x 2 directions)
    H = G // 8
    H2 = 2 * H

    # ---- (1)+(2) fused embedding gather, pre-merged for both directions ----
    # emb2[s] = [emb[words[s]] | emb[words[L-1-s]]]; every row is fully written below,
    # so no zero-init of the scratch buffers is needed.
    for s in range(L):
        row_f = emb_tbl_ref[pl.ds(words_ref[s], 1), :]          # (1, E)
        row_b = emb_tbl_ref[pl.ds(words_ref[L - 1 - s], 1), :]  # (1, E)
        emb2_buf[pl.ds(s, 1), :] = jnp.concatenate([row_f, row_b], axis=1)

    # Hoisted input projection for BOTH directions in ONE matmul, bias folded in.
    # (i/f/o columns of w_ih/b are pre-halved host-side for the tanh-sigmoid trick.)
    x_buf[...] = (jnp.dot(emb2_buf[...], w_ih_ref[...],
                          preferred_element_type=jnp.float32) + b_ref[...])

    h = jnp.zeros((1, H2), jnp.float32)    # [h_fwd | h_bwd]
    c = jnp.zeros((1, H2), jnp.float32)    # [c_fwd | c_bwd]

    # ---- fused fwd/bwd recurrence, fully unrolled (static L) ----
    for s in range(L):
        gates = x_buf[pl.ds(s, 1), :] + jnp.dot(
            h, w_hh_ref[...], preferred_element_type=jnp.float32)   # (1, 8H)

        # (3) single EUP pass: i/f/o columns were pre-halved, so tanh gives
        # 2*sigmoid-1 for them and tanh for g directly.
        t = jnp.tanh(gates)
        sig = 0.5 * t[:, 0:3 * H2] + 0.5        # [i | f | o], each 2H wide ([fwd|bwd])
        g = t[:, 3 * H2:4 * H2]

        c = sig[:, H2:2 * H2] * c + sig[:, 0:H2] * g
        h = sig[:, 2 * H2:3 * H2] * jnp.tanh(c)

        # Per-step hidden stores (static rows) ride in otherwise-idle store slots.
        h_buf[pl.ds(s, 1), 0:H] = h[:, 0:H]             # fwd hidden @ time s
        h_buf[pl.ds(L - 1 - s, 1), H:H2] = h[:, H:H2]   # bwd hidden @ time L-1-s

    # ---- single output projection over the whole sequence ----
    out_ref[...] = (jnp.dot(h_buf[...], w_out_ref[...],
                            preferred_element_type=jnp.float32) + b_out_ref[...])


def init_params(key, vocab_size, embedding_dim, hidden_dim, tagset_size):
    """Parameters in PyTorch-equivalent layout (weights pre-transposed to (in, 4H),
    gate column order [i, f, g, o]; bias = b_ih + b_hh)."""
    E, H, T = embedding_dim, hidden_dim, tagset_size
    ks = jax.random.split(key, 12)
    k = 1.0 / jnp.sqrt(H)
    u = lambda kk, shape: jax.random.uniform(kk, shape, jnp.float32, -k, k)
    return {
        "embedding": jax.random.normal(ks[0], (vocab_size, E), jnp.float32),
        "w_ih_f": u(ks[1], (E, 4 * H)),
        "w_hh_f": u(ks[2], (H, 4 * H)),
        "b_f":    u(ks[3], (1, 4 * H)) + u(ks[4], (1, 4 * H)),
        "w_ih_b": u(ks[5], (E, 4 * H)),
        "w_hh_b": u(ks[6], (H, 4 * H)),
        "b_b":    u(ks[7], (1, 4 * H)) + u(ks[8], (1, 4 * H)),
        "w_out":  u(ks[9], (2 * H, T)),
        "b_out":  u(ks[10], (1, T)),
    }


def pack_params(params):
    """Repack per-direction PyTorch-layout weights into the fused kernel layout.

    Kernel gate layout along the last (lane) dim, width 8H:
        [i_f, i_b, f_f, f_b, o_f, o_b, g_f, g_b]   (gate-major, direction-minor)
    - W_ih is stacked to (2E, 8H): rows 0:E feed only forward-gate columns, rows E:2E feed
      only backward-gate columns, so a single (L,2E)@(2E,8H) matmul over the
      [emb_fwd | emb_bwd] gather buffer produces the already-merged gate inputs.
    - W_hh is block-diagonal (2H, 8H) so h_both (1,2H) drives both directions in one op.
    - The i/f/o gate columns of W_ih / W_hh / bias are scaled by 0.5 so the kernel can
      evaluate all sigmoids via a single tanh: sigmoid(x) = 0.5*tanh(x/2) + 0.5.
    One-time host-side prep.
    """
    H = params["w_hh_f"].shape[0]
    G = 8 * H

    def gate_cols(w):   # (in, 4H) in PyTorch order [i, f, g, o] -> list [i, f, o, g]
        return [w[:, 0:H], w[:, H:2 * H], w[:, 3 * H:4 * H], w[:, 2 * H:3 * H]]

    def combine(wf, wb):
        gf, gb = gate_cols(wf), gate_cols(wb)
        return jnp.concatenate(
            [jnp.concatenate([gf[k], gb[k]], axis=1) for k in range(4)], axis=1)

    col = jnp.arange(G)
    fwd_col = ((col % (2 * H)) < H).astype(jnp.float32)[None, :]      # (1, 8H)
    ifo_scale = jnp.where(col < 6 * H, 0.5, 1.0)[None, :]             # halve i|f|o cols

    w_ih = combine(params["w_ih_f"], params["w_ih_b"])                # (E, 8H)
    w_ih2 = jnp.concatenate([w_ih * fwd_col, w_ih * (1.0 - fwd_col)], axis=0)  # (2E, 8H)

    zeros_hh = jnp.zeros_like(params["w_hh_f"])
    w_hh = combine(jnp.concatenate([params["w_hh_f"], zeros_hh], axis=0),
                   jnp.concatenate([zeros_hh, params["w_hh_b"]], axis=0))      # (2H, 8H)

    b = combine(params["b_f"], params["b_b"])                         # (1, 8H)

    return {
        "embedding": params["embedding"],
        "w_ih2": w_ih2 * ifo_scale,
        "w_hh": w_hh * ifo_scale,
        "b": b * ifo_scale,
        "w_out": params["w_out"],                                     # (2H, T)
        "b_out": params["b_out"],                                     # (1, T)
    }


def bilstm_tagger_forward(words, packed):
    words = words.astype(jnp.int32)
    L = words.shape[0]
    E = packed["embedding"].shape[1]
    G = packed["w_ih2"].shape[1]
    H = G // 8
    T = packed["w_out"].shape[1]

    vmem = pl.BlockSpec(memory_space=pltpu.MemorySpace.VMEM)
    fn = pl.pallas_call(
        _bilstm_kernel,
        out_shape=jax.ShapeDtypeStruct((L, T), jnp.float32),
        grid_spec=pltpu.PrefetchScalarGridSpec(
            num_scalar_prefetch=1,                      # `words` -> SMEM
            grid=(1,),
            in_specs=[vmem] * 6,                        # emb table + 5 weight/bias tensors
            out_specs=vmem,
            scratch_shapes=[pltpu.VMEM((L, 2 * E), jnp.float32),   # gathered [fwd|bwd] emb
                            pltpu.VMEM((L, G), jnp.float32),       # hoisted gate projection
                            pltpu.VMEM((L, 2 * H), jnp.float32)],  # [h_fwd | h_bwd] per step
        ),
        compiler_params=pltpu.CompilerParams(dimension_semantics=("arbitrary",)),
    )
    return fn(words, packed["embedding"], packed["w_ih2"], packed["w_hh"],
              packed["b"], packed["w_out"], packed["b_out"])


def reference_forward(words, params):
    """Pure-JAX reference with identical math, using the original (unpacked) params."""
    emb = params["embedding"][words]
    H = params["w_hh_f"].shape[0]

    def make_scan(wi, wh, b):
        def step(carry, x):
            h, c = carry
            gates = x @ wi + h @ wh + b[0]
            i = jax.nn.sigmoid(gates[0:H])
            f = jax.nn.sigmoid(gates[H:2 * H])
            g = jnp.tanh(gates[2 * H:3 * H])
            o = jax.nn.sigmoid(gates[3 * H:4 * H])
            c = f * c + i * g
            h = o * jnp.tanh(c)
            return (h, c), h
        return step

    h0 = jnp.zeros((H,), jnp.float32)
    c0 = jnp.zeros((H,), jnp.float32)
    _, hf = lax.scan(make_scan(params["w_ih_f"], params["w_hh_f"], params["b_f"]),
                     (h0, c0), emb)
    _, hb = lax.scan(make_scan(params["w_ih_b"], params["w_hh_b"], params["b_b"]),
                     (h0, c0), emb[::-1])
    hb = hb[::-1]
    lstm_out = jnp.concatenate([hf, hb], axis=-1)
    return lstm_out @ params["w_out"] + params["b_out"][0]


if __name__ == "__main__":
    vocab_size, embedding_dim, hidden_dim, tagset_size = 20, 16, 32, 8
    seq_len = 8

    key = jax.random.PRNGKey(0)
    kp, kw = jax.random.split(key)
    params = init_params(kp, vocab_size, embedding_dim, hidden_dim, tagset_size)
    packed = pack_params(params)
    words = jax.random.randint(kw, (seq_len,), 0, vocab_size)

    logits = bilstm_tagger_forward(words, packed)
    jax.block_until_ready(logits)

    ref = reference_forward(words, params)
    assert logits.shape == (seq_len, tagset_size)
    assert jnp.allclose(logits, ref, rtol=1e-3, atol=5e-3), \
        f"max abs err {jnp.max(jnp.abs(logits - ref))}"

    print("KERNEL_OK")
</pallas_src>

<mosaic_0001>
module attributes {stable_mosaic.version = 11 : i64} {
  func.func @_bilstm_kernel(%arg0: i32, %arg1: memref<8xi32, #tpu.memory_space<smem>>, %arg2: memref<20x16xf32, #tpu.memory_space<vmem>>, %arg3: memref<32x256xf32, #tpu.memory_space<vmem>>, %arg4: memref<64x256xf32, #tpu.memory_space<vmem>>, %arg5: memref<1x256xf32, #tpu.memory_space<vmem>>, %arg6: memref<64x8xf32, #tpu.memory_space<vmem>>, %arg7: memref<1x8xf32, #tpu.memory_space<vmem>>, %arg8: memref<8x8xf32, #tpu.memory_space<vmem>>, %arg9: memref<8x32xf32, #tpu.memory_space<vmem>>, %arg10: memref<8x256xf32, #tpu.memory_space<vmem>>, %arg11: memref<8x64xf32, #tpu.memory_space<vmem>>) attributes {dimension_semantics = [#tpu.dimension_semantics<arbitrary>], iteration_bounds = array<i64: 1>, scalar_prefetch = 1 : i64, scratch_operands = 3 : i64, tpu.core_type = #tpu.core_type<tc>, window_params = [{pipeline_mode = #tpu.pipeline_mode<synchronous>, transform_indices = @transform_0, window_bounds = array<i64: 20, 16>}, {pipeline_mode = #tpu.pipeline_mode<synchronous>, transform_indices = @transform_1, window_bounds = array<i64: 32, 256>}, {pipeline_mode = #tpu.pipeline_mode<synchronous>, transform_indices = @transform_2, window_bounds = array<i64: 64, 256>}, {pipeline_mode = #tpu.pipeline_mode<synchronous>, transform_indices = @transform_3, window_bounds = array<i64: 1, 256>}, {pipeline_mode = #tpu.pipeline_mode<synchronous>, transform_indices = @transform_4, window_bounds = array<i64: 64, 8>}, {pipeline_mode = #tpu.pipeline_mode<synchronous>, transform_indices = @transform_5, window_bounds = array<i64: 1, 8>}, {pipeline_mode = #tpu.pipeline_mode<synchronous>, transform_indices = @transform_6, window_bounds = array<i64: 8, 8>}]} {
    %c0 = arith.constant 0 : index
    %0 = memref.load %arg1[%c0] : memref<8xi32, #tpu.memory_space<smem>>
    %1 = arith.index_cast %0 : i32 to index
    %c0_0 = arith.constant 0 : index
    %2 = vector.load %arg2[%1, %c0_0] : memref<20x16xf32, #tpu.memory_space<vmem>>, vector<1x16xf32>
    %c7 = arith.constant 7 : index
    %3 = memref.load %arg1[%c7] : memref<8xi32, #tpu.memory_space<smem>>
    %4 = arith.index_cast %3 : i32 to index
    %c0_1 = arith.constant 0 : index
    %5 = vector.load %arg2[%4, %c0_1] : memref<20x16xf32, #tpu.memory_space<vmem>>, vector<1x16xf32>
    %6 = tpu.concatenate %2, %5 in 1 : vector<1x16xf32>, vector<1x16xf32> -> vector<1x32xf32>
    %c0_2 = arith.constant 0 : index
    %c0_3 = arith.constant 0 : index
    %7 = vector.load %arg9[%c0_2, %c0_3] : memref<8x32xf32, #tpu.memory_space<vmem>>, vector<1x32xf32>
    tpu.vector_store %arg9[%c0_2, %c0_3], %6 {strides = array<i32>} : memref<8x32xf32, #tpu.memory_space<vmem>>, vector<1x32xf32>,
    %c1 = arith.constant 1 : index
    %8 = memref.load %arg1[%c1] : memref<8xi32, #tpu.memory_space<smem>>
    %9 = arith.index_cast %8 : i32 to index
    %c0_4 = arith.constant 0 : index
    %10 = vector.load %arg2[%9, %c0_4] : memref<20x16xf32, #tpu.memory_space<vmem>>, vector<1x16xf32>
    %c6 = arith.constant 6 : index
    %11 = memref.load %arg1[%c6] : memref<8xi32, #tpu.memory_space<smem>>
    %12 = arith.index_cast %11 : i32 to index
    %c0_5 = arith.constant 0 : index
    %13 = vector.load %arg2[%12, %c0_5] : memref<20x16xf32, #tpu.memory_space<vmem>>, vector<1x16xf32>
    %14 = tpu.concatenate %10, %13 in 1 : vector<1x16xf32>, vector<1x16xf32> -> vector<1x32xf32>
    %c1_6 = arith.constant 1 : index
    %c0_7 = arith.constant 0 : index
    %15 = vector.load %arg9[%c1_6, %c0_7] : memref<8x32xf32, #tpu.memory_space<vmem>>, vector<1x32xf32>
    tpu.vector_store %arg9[%c1_6, %c0_7], %14 {strides = array<i32>} : memref<8x32xf32, #tpu.memory_space<vmem>>, vector<1x32xf32>,
    %c2 = arith.constant 2 : index
    %16 = memref.load %arg1[%c2] : memref<8xi32, #tpu.memory_space<smem>>
    %17 = arith.index_cast %16 : i32 to index
    %c0_8 = arith.constant 0 : index
    %18 = vector.load %arg2[%17, %c0_8] : memref<20x16xf32, #tpu.memory_space<vmem>>, vector<1x16xf32>
    %c5 = arith.constant 5 : index
    %19 = memref.load %arg1[%c5] : memref<8xi32, #tpu.memory_space<smem>>
    %20 = arith.index_cast %19 : i32 to index
    %c0_9 = arith.constant 0 : index
    %21 = vector.load %arg2[%20, %c0_9] : memref<20x16xf32, #tpu.memory_space<vmem>>, vector<1x16xf32>
    %22 = tpu.concatenate %18, %21 in 1 : vector<1x16xf32>, vector<1x16xf32> -> vector<1x32xf32>
    %c2_10 = arith.constant 2 : index
    %c0_11 = arith.constant 0 : index
    %23 = vector.load %arg9[%c2_10, %c0_11] : memref<8x32xf32, #tpu.memory_space<vmem>>, vector<1x32xf32>
    tpu.vector_store %arg9[%c2_10, %c0_11], %22 {strides = array<i32>} : memref<8x32xf32, #tpu.memory_space<vmem>>, vector<1x32xf32>,
    %c3 = arith.constant 3 : index
    %24 = memref.load %arg1[%c3] : memref<8xi32, #tpu.memory_space<smem>>
    %25 = arith.index_cast %24 : i32 to index
    %c0_12 = arith.constant 0 : index
    %26 = vector.load %arg2[%25, %c0_12] : memref<20x16xf32, #tpu.memory_space<vmem>>, vector<1x16xf32>
    %c4 = arith.constant 4 : index
    %27 = memref.load %arg1[%c4] : memref<8xi32, #tpu.memory_space<smem>>
    %28 = arith.index_cast %27 : i32 to index
    %c0_13 = arith.constant 0 : index
    %29 = vector.load %arg2[%28, %c0_13] : memref<20x16xf32, #tpu.memory_space<vmem>>, vector<1x16xf32>
    %30 = tpu.concatenate %26, %29 in 1 : vector<1x16xf32>, vector<1x16xf32> -> vector<1x32xf32>
    %c3_14 = arith.constant 3 : index
    %c0_15 = arith.constant 0 : index
    %31 = vector.load %arg9[%c3_14, %c0_15] : memref<8x32xf32, #tpu.memory_space<vmem>>, vector<1x32xf32>
    tpu.vector_store %arg9[%c3_14, %c0_15], %30 {strides = array<i32>} : memref<8x32xf32, #tpu.memory_space<vmem>>, vector<1x32xf32>,
    %c4_16 = arith.constant 4 : index
    %32 = memref.load %arg1[%c4_16] : memref<8xi32, #tpu.memory_space<smem>>
    %33 = arith.index_cast %32 : i32 to index
    %c0_17 = arith.constant 0 : index
    %34 = vector.load %arg2[%33, %c0_17] : memref<20x16xf32, #tpu.memory_space<vmem>>, vector<1x16xf32>
    %c3_18 = arith.constant 3 : index
    %35 = memref.load %arg1[%c3_18] : memref<8xi32, #tpu.memory_space<smem>>
    %36 = arith.index_cast %35 : i32 to index
    %c0_19 = arith.constant 0 : index
    %37 = vector.load %arg2[%36, %c0_19] : memref<20x16xf32, #tpu.memory_space<vmem>>, vector<1x16xf32>
    %38 = tpu.concatenate %34, %37 in 1 : vector<1x16xf32>, vector<1x16xf32> -> vector<1x32xf32>
    %c4_20 = arith.constant 4 : index
    %c0_21 = arith.constant 0 : index
    %39 = vector.load %arg9[%c4_20, %c0_21] : memref<8x32xf32, #tpu.memory_space<vmem>>, vector<1x32xf32>
    tpu.vector_store %arg9[%c4_20, %c0_21], %38 {strides = array<i32>} : memref<8x32xf32, #tpu.memory_space<vmem>>, vector<1x32xf32>,
    %c5_22 = arith.constant 5 : index
    %40 = memref.load %arg1[%c5_22] : memref<8xi32, #tpu.memory_space<smem>>
    %41 = arith.index_cast %40 : i32 to index
    %c0_23 = arith.constant 0 : index
    %42 = vector.load %arg2[%41, %c0_23] : memref<20x16xf32, #tpu.memory_space<vmem>>, vector<1x16xf32>
    %c2_24 = arith.constant 2 : index
    %43 = memref.load %arg1[%c2_24] : memref<8xi32, #tpu.memory_space<smem>>
    %44 = arith.index_cast %43 : i32 to index
    %c0_25 = arith.constant 0 : index
    %45 = vector.load %arg2[%44, %c0_25] : memref<20x16xf32, #tpu.memory_space<vmem>>, vector<1x16xf32>
    %46 = tpu.concatenate %42, %45 in 1 : vector<1x16xf32>, vector<1x16xf32> -> vector<1x32xf32>
    %c5_26 = arith.constant 5 : index
    %c0_27 = arith.constant 0 : index
    %47 = vector.load %arg9[%c5_26, %c0_27] : memref<8x32xf32, #tpu.memory_space<vmem>>, vector<1x32xf32>
    tpu.vector_store %arg9[%c5_26, %c0_27], %46 {strides = array<i32>} : memref<8x32xf32, #tpu.memory_space<vmem>>, vector<1x32xf32>,
    %c6_28 = arith.constant 6 : index
    %48 = memref.load %arg1[%c6_28] : memref<8xi32, #tpu.memory_space<smem>>
    %49 = arith.index_cast %48 : i32 to index
    %c0_29 = arith.constant 0 : index
    %50 = vector.load %arg2[%49, %c0_29] : memref<20x16xf32, #tpu.memory_space<vmem>>, vector<1x16xf32>
    %c1_30 = arith.constant 1 : index
    %51 = memref.load %arg1[%c1_30] : memref<8xi32, #tpu.memory_space<smem>>
    %52 = arith.index_cast %51 : i32 to index
    %c0_31 = arith.constant 0 : index
    %53 = vector.load %arg2[%52, %c0_31] : memref<20x16xf32, #tpu.memory_space<vmem>>, vector<1x16xf32>
    %54 = tpu.concatenate %50, %53 in 1 : vector<1x16xf32>, vector<1x16xf32> -> vector<1x32xf32>
    %c6_32 = arith.constant 6 : index
    %c0_33 = arith.constant 0 : index
    %55 = vector.load %arg9[%c6_32, %c0_33] : memref<8x32xf32, #tpu.memory_space<vmem>>, vector<1x32xf32>
    tpu.vector_store %arg9[%c6_32, %c0_33], %54 {strides = array<i32>} : memref<8x32xf32, #tpu.memory_space<vmem>>, vector<1x32xf32>,
    %c7_34 = arith.constant 7 : index
    %56 = memref.load %arg1[%c7_34] : memref<8xi32, #tpu.memory_space<smem>>
    %57 = arith.index_cast %56 : i32 to index
    %c0_35 = arith.constant 0 : index
    %58 = vector.load %arg2[%57, %c0_35] : memref<20x16xf32, #tpu.memory_space<vmem>>, vector<1x16xf32>
    %c0_36 = arith.constant 0 : index
    %59 = memref.load %arg1[%c0_36] : memref<8xi32, #tpu.memory_space<smem>>
    %60 = arith.index_cast %59 : i32 to index
    %c0_37 = arith.constant 0 : index
    %61 = vector.load %arg2[%60, %c0_37] : memref<20x16xf32, #tpu.memory_space<vmem>>, vector<1x16xf32>
    %62 = tpu.concatenate %58, %61 in 1 : vector<1x16xf32>, vector<1x16xf32> -> vector<1x32xf32>
    %c7_38 = arith.constant 7 : index
    %c0_39 = arith.constant 0 : index
    %63 = vector.load %arg9[%c7_38, %c0_39] : memref<8x32xf32, #tpu.memory_space<vmem>>, vector<1x32xf32>
    tpu.vector_store %arg9[%c7_38, %c0_39], %62 {strides = array<i32>} : memref<8x32xf32, #tpu.memory_space<vmem>>, vector<1x32xf32>,
    %c0_40 = arith.constant 0 : index
    %c0_41 = arith.constant 0 : index
    %64 = vector.load %arg9[%c0_40, %c0_41] : memref<8x32xf32, #tpu.memory_space<vmem>>, vector<8x32xf32>
    %c0_42 = arith.constant 0 : index
    %c0_43 = arith.constant 0 : index
    %65 = vector.load %arg3[%c0_42, %c0_43] : memref<32x256xf32, #tpu.memory_space<vmem>>, vector<32x256xf32>
    %cst = arith.constant dense<0.000000e+00> : vector<8x256xf32>
    %66 = tpu.matmul %64, %65, %cst {dimension_numbers = #tpu.dot_dimension_numbers<[1], [0], [0], [1], [0, 0, 1, 1], [], []>} : vector<8x32xf32>, vector<32x256xf32>, vector<8x256xf32> -> vector<8x256xf32>
    %c0_44 = arith.constant 0 : index
    %c0_45 = arith.constant 0 : index
    %67 = vector.load %arg5[%c0_44, %c0_45] : memref<1x256xf32, #tpu.memory_space<vmem>>, vector<1x256xf32>
    %68 = vector.broadcast %67 : vector<1x256xf32> to vector<8x256xf32>
    %69 = arith.addf %66, %68 : vector<8x256xf32>
    %c0_46 = arith.constant 0 : index
    %c0_47 = arith.constant 0 : index
    %70 = vector.load %arg10[%c0_46, %c0_47] : memref<8x256xf32, #tpu.memory_space<vmem>>, vector<8x256xf32>
    tpu.vector_store %arg10[%c0_46, %c0_47], %69 {strides = array<i32>} : memref<8x256xf32, #tpu.memory_space<vmem>>, vector<8x256xf32>,
    %cst_48 = arith.constant 0.000000e+00 : f32
    %71 = vector.broadcast %cst_48 : f32 to vector<1x64xf32>
    %cst_49 = arith.constant 0.000000e+00 : f32
    %72 = vector.broadcast %cst_49 : f32 to vector<1x64xf32>
    %c0_50 = arith.constant 0 : index
    %c0_51 = arith.constant 0 : index
    %73 = vector.load %arg10[%c0_50, %c0_51] : memref<8x256xf32, #tpu.memory_space<vmem>>, vector<1x256xf32>
    %c0_52 = arith.constant 0 : index
    %c0_53 = arith.constant 0 : index
    %74 = vector.load %arg4[%c0_52, %c0_53] : memref<64x256xf32, #tpu.memory_space<vmem>>, vector<64x256xf32>
    %cst_54 = arith.constant dense<0.000000e+00> : vector<1x256xf32>
    %75 = tpu.matmul %71, %74, %cst_54 {dimension_numbers = #tpu.dot_dimension_numbers<[1], [0], [0], [1], [0, 0, 1, 1], [], []>} : vector<1x64xf32>, vector<64x256xf32>, vector<1x256xf32> -> vector<1x256xf32>
    %76 = arith.addf %73, %75 : vector<1x256xf32>
    %77 = math.tanh %76 : vector<1x256xf32>
    %78 = vector.extract_strided_slice %77 {offsets = [0, 0], sizes = [1, 192], strides = [1, 1]} : vector<1x256xf32> to vector<1x192xf32>
    %cst_55 = arith.constant 5.000000e-01 : f32
    %79 = vector.broadcast %cst_55 : f32 to vector<1x192xf32>
    %80 = arith.mulf %79, %78 : vector<1x192xf32>
    %cst_56 = arith.constant 5.000000e-01 : f32
    %81 = vector.broadcast %cst_56 : f32 to vector<1x192xf32>
    %82 = arith.addf %80, %81 : vector<1x192xf32>
    %83 = vector.extract_strided_slice %77 {offsets = [0, 192], sizes = [1, 64], strides = [1, 1]} : vector<1x256xf32> to vector<1x64xf32>
    %84 = vector.extract_strided_slice %82 {offsets = [0, 64], sizes = [1, 64], strides = [1, 1]} : vector<1x192xf32> to vector<1x64xf32>
    %85 = arith.mulf %84, %72 : vector<1x64xf32>
    %86 = vector.extract_strided_slice %82 {offsets = [0, 0], sizes = [1, 64], strides = [1, 1]} : vector<1x192xf32> to vector<1x64xf32>
    %87 = arith.mulf %86, %83 : vector<1x64xf32>
    %88 = arith.addf %85, %87 : vector<1x64xf32>
    %89 = vector.extract_strided_slice %82 {offsets = [0, 128], sizes = [1, 64], strides = [1, 1]} : vector<1x192xf32> to vector<1x64xf32>
    %90 = math.tanh %88 : vector<1x64xf32>
    %91 = arith.mulf %89, %90 : vector<1x64xf32>
    %92 = vector.extract_strided_slice %91 {offsets = [0, 0], sizes = [1, 32], strides = [1, 1]} : vector<1x64xf32> to vector<1x32xf32>
    %c0_57 = arith.constant 0 : index
    %c0_58 = arith.constant 0 : index
    %93 = vector.load %arg11[%c0_57, %c0_58] : memref<8x64xf32, #tpu.memory_space<vmem>>, vector<1x32xf32>
    tpu.vector_store %arg11[%c0_57, %c0_58], %92 {strides = array<i32>} : memref<8x64xf32, #tpu.memory_space<vmem>>, vector<1x32xf32>,
    %94 = vector.extract_strided_slice %91 {offsets = [0, 32], sizes = [1, 32], strides = [1, 1]} : vector<1x64xf32> to vector<1x32xf32>
    %c7_59 = arith.constant 7 : index
    %c32 = arith.constant 32 : index
    %95 = vector.load %arg11[%c7_59, %c32] : memref<8x64xf32, #tpu.memory_space<vmem>>, vector<1x32xf32>
    tpu.vector_store %arg11[%c7_59, %c32], %94 {strides = array<i32>} : memref<8x64xf32, #tpu.memory_space<vmem>>, vector<1x32xf32>,
    %c1_60 = arith.constant 1 : index
    %c0_61 = arith.constant 0 : index
    %96 = vector.load %arg10[%c1_60, %c0_61] : memref<8x256xf32, #tpu.memory_space<vmem>>, vector<1x256xf32>
    %c0_62 = arith.constant 0 : index
    %c0_63 = arith.constant 0 : index
    %97 = vector.load %arg4[%c0_62, %c0_63] : memref<64x256xf32, #tpu.memory_space<vmem>>, vector<64x256xf32>
    %cst_64 = arith.constant dense<0.000000e+00> : vector<1x256xf32>
    %98 = tpu.matmul %91, %97, %cst_64 {dimension_numbers = #tpu.dot_dimension_numbers<[1], [0], [0], [1], [0, 0, 1, 1], [], []>} : vector<1x64xf32>, vector<64x256xf32>, vector<1x256xf32> -> vector<1x256xf32>
    %99 = arith.addf %96, %98 : vector<1x256xf32>
    %100 = math.tanh %99 : vector<1x256xf32>
    %101 = vector.extract_strided_slice %100 {offsets = [0, 0], sizes = [1, 192], strides = [1, 1]} : vector<1x256xf32> to vector<1x192xf32>
    %cst_65 = arith.constant 5.000000e-01 : f32
    %102 = vector.broadcast %cst_65 : f32 to vector<1x192xf32>
    %103 = arith.mulf %102, %101 : vector<1x192xf32>
    %cst_66 = arith.constant 5.000000e-01 : f32
    %104 = vector.broadcast %cst_66 : f32 to vector<1x192xf32>
    %105 = arith.addf %103, %104 : vector<1x192xf32>
    %106 = vector.extract_strided_slice %100 {offsets = [0, 192], sizes = [1, 64], strides = [1, 1]} : vector<1x256xf32> to vector<1x64xf32>
    %107 = vector.extract_strided_slice %105 {offsets = [0, 64], sizes = [1, 64], strides = [1, 1]} : vector<1x192xf32> to vector<1x64xf32>
    %108 = arith.mulf %107, %88 : vector<1x64xf32>
    %109 = vector.extract_strided_slice %105 {offsets = [0, 0], sizes = [1, 64], strides = [1, 1]} : vector<1x192xf32> to vector<1x64xf32>
    %110 = arith.mulf %109, %106 : vector<1x64xf32>
    %111 = arith.addf %108, %110 : vector<1x64xf32>
    %112 = vector.extract_strided_slice %105 {offsets = [0, 128], sizes = [1, 64], strides = [1, 1]} : vector<1x192xf32> to vector<1x64xf32>
    %113 = math.tanh %111 : vector<1x64xf32>
    %114 = arith.mulf %112, %113 : vector<1x64xf32>
    %115 = vector.extract_strided_slice %114 {offsets = [0, 0], sizes = [1, 32], strides = [1, 1]} : vector<1x64xf32> to vector<1x32xf32>
    %c1_67 = arith.constant 1 : index
    %c0_68 = arith.constant 0 : index
    %116 = vector.load %arg11[%c1_67, %c0_68] : memref<8x64xf32, #tpu.memory_space<vmem>>, vector<1x32xf32>
    tpu.vector_store %arg11[%c1_67, %c0_68], %115 {strides = array<i32>} : memref<8x64xf32, #tpu.memory_space<vmem>>, vector<1x32xf32>,
    %117 = vector.extract_strided_slice %114 {offsets = [0, 32], sizes = [1, 32], strides = [1, 1]} : vector<1x64xf32> to vector<1x32xf32>
    %c6_69 = arith.constant 6 : index
    %c32_70 = arith.constant 32 : index
    %118 = vector.load %arg11[%c6_69, %c32_70] : memref<8x64xf32, #tpu.memory_space<vmem>>, vector<1x32xf32>
    tpu.vector_store %arg11[%c6_69, %c32_70], %117 {strides = array<i32>} : memref<8x64xf32, #tpu.memory_space<vmem>>, vector<1x32xf32>,
    %c2_71 = arith.constant 2 : index
    %c0_72 = arith.constant 0 : index
    %119 = vector.load %arg10[%c2_71, %c0_72] : memref<8x256xf32, #tpu.memory_space<vmem>>, vector<1x256xf32>
    %c0_73 = arith.constant 0 : index
    %c0_74 = arith.constant 0 : index
    %120 = vector.load %arg4[%c0_73, %c0_74] : memref<64x256xf32, #tpu.memory_space<vmem>>, vector<64x256xf32>
    %cst_75 = arith.constant dense<0.000000e+00> : vector<1x256xf32>
    %121 = tpu.matmul %114, %120, %cst_75 {dimension_numbers = #tpu.dot_dimension_numbers<[1], [0], [0], [1], [0, 0, 1, 1], [], []>} : vector<1x64xf32>, vector<64x256xf32>, vector<1x256xf32> -> vector<1x256xf32>
    %122 = arith.addf %119, %121 : vector<1x256xf32>
    %123 = math.tanh %122 : vector<1x256xf32>
    %124 = vector.extract_strided_slice %123 {offsets = [0, 0], sizes = [1, 192], strides = [1, 1]} : vector<1x256xf32> to vector<1x192xf32>
    %cst_76 = arith.constant 5.000000e-01 : f32
    %125 = vector.broadcast %cst_76 : f32 to vector<1x192xf32>
    %126 = arith.mulf %125, %124 : vector<1x192xf32>
    %cst_77 = arith.constant 5.000000e-01 : f32
    %127 = vector.broadcast %cst_77 : f32 to vector<1x192xf32>
    %128 = arith.addf %126, %127 : vector<1x192xf32>
    %129 = vector.extract_strided_slice %123 {offsets = [0, 192], sizes = [1, 64], strides = [1, 1]} : vector<1x256xf32> to vector<1x64xf32>
    %130 = vector.extract_strided_slice %128 {offsets = [0, 64], sizes = [1, 64], strides = [1, 1]} : vector<1x192xf32> to vector<1x64xf32>
    %131 = arith.mulf %130, %111 : vector<1x64xf32>
    %132 = vector.extract_strided_slice %128 {offsets = [0, 0], sizes = [1, 64], strides = [1, 1]} : vector<1x192xf32> to vector<1x64xf32>
    %133 = arith.mulf %132, %129 : vector<1x64xf32>
    %134 = arith.addf %131, %133 : vector<1x64xf32>
    %135 = vector.extract_strided_slice %128 {offsets = [0, 128], sizes = [1, 64], strides = [1, 1]} : vector<1x192xf32> to vector<1x64xf32>
    %136 = math.tanh %134 : vector<1x64xf32>
    %137 = arith.mulf %135, %136 : vector<1x64xf32>
    %138 = vector.extract_strided_slice %137 {offsets = [0, 0], sizes = [1, 32], strides = [1, 1]} : vector<1x64xf32> to vector<1x32xf32>
    %c2_78 = arith.constant 2 : index
    %c0_79 = arith.constant 0 : index
    %139 = vector.load %arg11[%c2_78, %c0_79] : memref<8x64xf32, #tpu.memory_space<vmem>>, vector<1x32xf32>
    tpu.vector_store %arg11[%c2_78, %c0_79], %138 {strides = array<i32>} : memref<8x64xf32, #tpu.memory_space<vmem>>, vector<1x32xf32>,
    %140 = vector.extract_strided_slice %137 {offsets = [0, 32], sizes = [1, 32], strides = [1, 1]} : vector<1x64xf32> to vector<1x32xf32>
    %c5_80 = arith.constant 5 : index
    %c32_81 = arith.constant 32 : index
    %141 = vector.load %arg11[%c5_80, %c32_81] : memref<8x64xf32, #tpu.memory_space<vmem>>, vector<1x32xf32>
    tpu.vector_store %arg11[%c5_80, %c32_81], %140 {strides = array<i32>} : memref<8x64xf32, #tpu.memory_space<vmem>>, vector<1x32xf32>,
    %c3_82 = arith.constant 3 : index
    %c0_83 = arith.constant 0 : index
    %142 = vector.load %arg10[%c3_82, %c0_83] : memref<8x256xf32, #tpu.memory_space<vmem>>, vector<1x256xf32>
    %c0_84 = arith.constant 0 : index
    %c0_85 = arith.constant 0 : index
    %143 = vector.load %arg4[%c0_84, %c0_85] : memref<64x256xf32, #tpu.memory_space<vmem>>, vector<64x256xf32>
    %cst_86 = arith.constant dense<0.000000e+00> : vector<1x256xf32>
    %144 = tpu.matmul %137, %143, %cst_86 {dimension_numbers = #tpu.dot_dimension_numbers<[1], [0], [0], [1], [0, 0, 1, 1], [], []>} : vector<1x64xf32>, vector<64x256xf32>, vector<1x256xf32> -> vector<1x256xf32>
    %145 = arith.addf %142, %144 : vector<1x256xf32>
    %146 = math.tanh %145 : vector<1x256xf32>
    %147 = vector.extract_strided_slice %146 {offsets = [0, 0], sizes = [1, 192], strides = [1, 1]} : vector<1x256xf32> to vector<1x192xf32>
    %cst_87 = arith.constant 5.000000e-01 : f32
    %148 = vector.broadcast %cst_87 : f32 to vector<1x192xf32>
    %149 = arith.mulf %148, %147 : vector<1x192xf32>
    %cst_88 = arith.constant 5.000000e-01 : f32
    %150 = vector.broadcast %cst_88 : f32 to vector<1x192xf32>
    %151 = arith.addf %149, %150 : vector<1x192xf32>
    %152 = vector.extract_strided_slice %146 {offsets = [0, 192], sizes = [1, 64], strides = [1, 1]} : vector<1x256xf32> to vector<1x64xf32>
    %153 = vector.extract_strided_slice %151 {offsets = [0, 64], sizes = [1, 64], strides = [1, 1]} : vector<1x192xf32> to vector<1x64xf32>
    %154 = arith.mulf %153, %134 : vector<1x64xf32>
    %155 = vector.extract_strided_slice %151 {offsets = [0, 0], sizes = [1, 64], strides = [1, 1]} : vector<1x192xf32> to vector<1x64xf32>
    %156 = arith.mulf %155, %152 : vector<1x64xf32>
    %157 = arith.addf %154, %156 : vector<1x64xf32>
    %158 = vector.extract_strided_slice %151 {offsets = [0, 128], sizes = [1, 64], strides = [1, 1]} : vector<1x192xf32> to vector<1x64xf32>
    %159 = math.tanh %157 : vector<1x64xf32>
    %160 = arith.mulf %158, %159 : vector<1x64xf32>
    %161 = vector.extract_strided_slice %160 {offsets = [0, 0], sizes = [1, 32], strides = [1, 1]} : vector<1x64xf32> to vector<1x32xf32>
    %c3_89 = arith.constant 3 : index
    %c0_90 = arith.constant 0 : index
    %162 = vector.load %arg11[%c3_89, %c0_90] : memref<8x64xf32, #tpu.memory_space<vmem>>, vector<1x32xf32>
    tpu.vector_store %arg11[%c3_89, %c0_90], %161 {strides = array<i32>} : memref<8x64xf32, #tpu.memory_space<vmem>>, vector<1x32xf32>,
    %163 = vector.extract_strided_slice %160 {offsets = [0, 32], sizes = [1, 32], strides = [1, 1]} : vector<1x64xf32> to vector<1x32xf32>
    %c4_91 = arith.constant 4 : index
    %c32_92 = arith.constant 32 : index
    %164 = vector.load %arg11[%c4_91, %c32_92] : memref<8x64xf32, #tpu.memory_space<vmem>>, vector<1x32xf32>
    tpu.vector_store %arg11[%c4_91, %c32_92], %163 {strides = array<i32>} : memref<8x64xf32, #tpu.memory_space<vmem>>, vector<1x32xf32>,
    %c4_93 = arith.constant 4 : index
    %c0_94 = arith.constant 0 : index
    %165 = vector.load %arg10[%c4_93, %c0_94] : memref<8x256xf32, #tpu.memory_space<vmem>>, vector<1x256xf32>
    %c0_95 = arith.constant 0 : index
    %c0_96 = arith.constant 0 : index
    %166 = vector.load %arg4[%c0_95, %c0_96] : memref<64x256xf32, #tpu.memory_space<vmem>>, vector<64x256xf32>
    %cst_97 = arith.constant dense<0.000000e+00> : vector<1x256xf32>
    %167 = tpu.matmul %160, %166, %cst_97 {dimension_numbers = #tpu.dot_dimension_numbers<[1], [0], [0], [1], [0, 0, 1, 1], [], []>} : vector<1x64xf32>, vector<64x256xf32>, vector<1x256xf32> -> vector<1x256xf32>
    %168 = arith.addf %165, %167 : vector<1x256xf32>
    %169 = math.tanh %168 : vector<1x256xf32>
    %170 = vector.extract_strided_slice %169 {offsets = [0, 0], sizes = [1, 192], strides = [1, 1]} : vector<1x256xf32> to vector<1x192xf32>
    %cst_98 = arith.constant 5.000000e-01 : f32
    %171 = vector.broadcast %cst_98 : f32 to vector<1x192xf32>
    %172 = arith.mulf %171, %170 : vector<1x192xf32>
    %cst_99 = arith.constant 5.000000e-01 : f32
    %173 = vector.broadcast %cst_99 : f32 to vector<1x192xf32>
    %174 = arith.addf %172, %173 : vector<1x192xf32>
    %175 = vector.extract_strided_slice %169 {offsets = [0, 192], sizes = [1, 64], strides = [1, 1]} : vector<1x256xf32> to vector<1x64xf32>
    %176 = vector.extract_strided_slice %174 {offsets = [0, 64], sizes = [1, 64], strides = [1, 1]} : vector<1x192xf32> to vector<1x64xf32>
    %177 = arith.mulf %176, %157 : vector<1x64xf32>
    %178 = vector.extract_strided_slice %174 {offsets = [0, 0], sizes = [1, 64], strides = [1, 1]} : vector<1x192xf32> to vector<1x64xf32>
    %179 = arith.mulf %178, %175 : vector<1x64xf32>
    %180 = arith.addf %177, %179 : vector<1x64xf32>
    %181 = vector.extract_strided_slice %174 {offsets = [0, 128], sizes = [1, 64], strides = [1, 1]} : vector<1x192xf32> to vector<1x64xf32>
    %182 = math.tanh %180 : vector<1x64xf32>
    %183 = arith.mulf %181, %182 : vector<1x64xf32>
    %184 = vector.extract_strided_slice %183 {offsets = [0, 0], sizes = [1, 32], strides = [1, 1]} : vector<1x64xf32> to vector<1x32xf32>
    %c4_100 = arith.constant 4 : index
    %c0_101 = arith.constant 0 : index
    %185 = vector.load %arg11[%c4_100, %c0_101] : memref<8x64xf32, #tpu.memory_space<vmem>>, vector<1x32xf32>
    tpu.vector_store %arg11[%c4_100, %c0_101], %184 {strides = array<i32>} : memref<8x64xf32, #tpu.memory_space<vmem>>, vector<1x32xf32>,
    %186 = vector.extract_strided_slice %183 {offsets = [0, 32], sizes = [1, 32], strides = [1, 1]} : vector<1x64xf32> to vector<1x32xf32>
    %c3_102 = arith.constant 3 : index
    %c32_103 = arith.constant 32 : index
    %187 = vector.load %arg11[%c3_102, %c32_103] : memref<8x64xf32, #tpu.memory_space<vmem>>, vector<1x32xf32>
    tpu.vector_store %arg11[%c3_102, %c32_103], %186 {strides = array<i32>} : memref<8x64xf32, #tpu.memory_space<vmem>>, vector<1x32xf32>,
    %c5_104 = arith.constant 5 : index
    %c0_105 = arith.constant 0 : index
    %188 = vector.load %arg10[%c5_104, %c0_105] : memref<8x256xf32, #tpu.memory_space<vmem>>, vector<1x256xf32>
    %c0_106 = arith.constant 0 : index
    %c0_107 = arith.constant 0 : index
    %189 = vector.load %arg4[%c0_106, %c0_107] : memref<64x256xf32, #tpu.memory_space<vmem>>, vector<64x256xf32>
    %cst_108 = arith.constant dense<0.000000e+00> : vector<1x256xf32>
    %190 = tpu.matmul %183, %189, %cst_108 {dimension_numbers = #tpu.dot_dimension_numbers<[1], [0], [0], [1], [0, 0, 1, 1], [], []>} : vector<1x64xf32>, vector<64x256xf32>, vector<1x256xf32> -> vector<1x256xf32>
    %191 = arith.addf %188, %190 : vector<1x256xf32>
    %192 = math.tanh %191 : vector<1x256xf32>
    %193 = vector.extract_strided_slice %192 {offsets = [0, 0], sizes = [1, 192], strides = [1, 1]} : vector<1x256xf32> to vector<1x192xf32>
    %cst_109 = arith.constant 5.000000e-01 : f32
    %194 = vector.broadcast %cst_109 : f32 to vector<1x192xf32>
    %195 = arith.mulf %194, %193 : vector<1x192xf32>
    %cst_110 = arith.constant 5.000000e-01 : f32
    %196 = vector.broadcast %cst_110 : f32 to vector<1x192xf32>
    %197 = arith.addf %195, %196 : vector<1x192xf32>
    %198 = vector.extract_strided_slice %192 {offsets = [0, 192], sizes = [1, 64], strides = [1, 1]} : vector<1x256xf32> to vector<1x64xf32>
    %199 = vector.extract_strided_slice %197 {offsets = [0, 64], sizes = [1, 64], strides = [1, 1]} : vector<1x192xf32> to vector<1x64xf32>
    %200 = arith.mulf %199, %180 : vector<1x64xf32>
    %201 = vector.extract_strided_slice %197 {offsets = [0, 0], sizes = [1, 64], strides = [1, 1]} : vector<1x192xf32> to vector<1x64xf32>
    %202 = arith.mulf %201, %198 : vector<1x64xf32>
    %203 = arith.addf %200, %202 : vector<1x64xf32>
    %204 = vector.extract_strided_slice %197 {offsets = [0, 128], sizes = [1, 64], strides = [1, 1]} : vector<1x192xf32> to vector<1x64xf32>
    %205 = math.tanh %203 : vector<1x64xf32>
    %206 = arith.mulf %204, %205 : vector<1x64xf32>
    %207 = vector.extract_strided_slice %206 {offsets = [0, 0], sizes = [1, 32], strides = [1, 1]} : vector<1x64xf32> to vector<1x32xf32>
    %c5_111 = arith.constant 5 : index
    %c0_112 = arith.constant 0 : index
    %208 = vector.load %arg11[%c5_111, %c0_112] : memref<8x64xf32, #tpu.memory_space<vmem>>, vector<1x32xf32>
    tpu.vector_store %arg11[%c5_111, %c0_112], %207 {strides = array<i32>} : memref<8x64xf32, #tpu.memory_space<vmem>>, vector<1x32xf32>,
    %209 = vector.extract_strided_slice %206 {offsets = [0, 32], sizes = [1, 32], strides = [1, 1]} : vector<1x64xf32> to vector<1x32xf32>
    %c2_113 = arith.constant 2 : index
    %c32_114 = arith.constant 32 : index
    %210 = vector.load %arg11[%c2_113, %c32_114] : memref<8x64xf32, #tpu.memory_space<vmem>>, vector<1x32xf32>
    tpu.vector_store %arg11[%c2_113, %c32_114], %209 {strides = array<i32>} : memref<8x64xf32, #tpu.memory_space<vmem>>, vector<1x32xf32>,
    %c6_115 = arith.constant 6 : index
    %c0_116 = arith.constant 0 : index
    %211 = vector.load %arg10[%c6_115, %c0_116] : memref<8x256xf32, #tpu.memory_space<vmem>>, vector<1x256xf32>
    %c0_117 = arith.constant 0 : index
    %c0_118 = arith.constant 0 : index
    %212 = vector.load %arg4[%c0_117, %c0_118] : memref<64x256xf32, #tpu.memory_space<vmem>>, vector<64x256xf32>
    %cst_119 = arith.constant dense<0.000000e+00> : vector<1x256xf32>
    %213 = tpu.matmul %206, %212, %cst_119 {dimension_numbers = #tpu.dot_dimension_numbers<[1], [0], [0], [1], [0, 0, 1, 1], [], []>} : vector<1x64xf32>, vector<64x256xf32>, vector<1x256xf32> -> vector<1x256xf32>
    %214 = arith.addf %211, %213 : vector<1x256xf32>
    %215 = math.tanh %214 : vector<1x256xf32>
    %216 = vector.extract_strided_slice %215 {offsets = [0, 0], sizes = [1, 192], strides = [1, 1]} : vector<1x256xf32> to vector<1x192xf32>
    %cst_120 = arith.constant 5.000000e-01 : f32
    %217 = vector.broadcast %cst_120 : f32 to vector<1x192xf32>
    %218 = arith.mulf %217, %216 : vector<1x192xf32>
    %cst_121 = arith.constant 5.000000e-01 : f32
    %219 = vector.broadcast %cst_121 : f32 to vector<1x192xf32>
    %220 = arith.addf %218, %219 : vector<1x192xf32>
    %221 = vector.extract_strided_slice %215 {offsets = [0, 192], sizes = [1, 64], strides = [1, 1]} : vector<1x256xf32> to vector<1x64xf32>
    %222 = vector.extract_strided_slice %220 {offsets = [0, 64], sizes = [1, 64], strides = [1, 1]} : vector<1x192xf32> to vector<1x64xf32>
    %223 = arith.mulf %222, %203 : vector<1x64xf32>
    %224 = vector.extract_strided_slice %220 {offsets = [0, 0], sizes = [1, 64], strides = [1, 1]} : vector<1x192xf32> to vector<1x64xf32>
    %225 = arith.mulf %224, %221 : vector<1x64xf32>
    %226 = arith.addf %223, %225 : vector<1x64xf32>
    %227 = vector.extract_strided_slice %220 {offsets = [0, 128], sizes = [1, 64], strides = [1, 1]} : vector<1x192xf32> to vector<1x64xf32>
    %228 = math.tanh %226 : vector<1x64xf32>
    %229 = arith.mulf %227, %228 : vector<1x64xf32>
    %230 = vector.extract_strided_slice %229 {offsets = [0, 0], sizes = [1, 32], strides = [1, 1]} : vector<1x64xf32> to vector<1x32xf32>
    %c6_122 = arith.constant 6 : index
    %c0_123 = arith.constant 0 : index
    %231 = vector.load %arg11[%c6_122, %c0_123] : memref<8x64xf32, #tpu.memory_space<vmem>>, vector<1x32xf32>
    tpu.vector_store %arg11[%c6_122, %c0_123], %230 {strides = array<i32>} : memref<8x64xf32, #tpu.memory_space<vmem>>, vector<1x32xf32>,
    %232 = vector.extract_strided_slice %229 {offsets = [0, 32], sizes = [1, 32], strides = [1, 1]} : vector<1x64xf32> to vector<1x32xf32>
    %c1_124 = arith.constant 1 : index
    %c32_125 = arith.constant 32 : index
    %233 = vector.load %arg11[%c1_124, %c32_125] : memref<8x64xf32, #tpu.memory_space<vmem>>, vector<1x32xf32>
    tpu.vector_store %arg11[%c1_124, %c32_125], %232 {strides = array<i32>} : memref<8x64xf32, #tpu.memory_space<vmem>>, vector<1x32xf32>,
    %c7_126 = arith.constant 7 : index
    %c0_127 = arith.constant 0 : index
    %234 = vector.load %arg10[%c7_126, %c0_127] : memref<8x256xf32, #tpu.memory_space<vmem>>, vector<1x256xf32>
    %c0_128 = arith.constant 0 : index
    %c0_129 = arith.constant 0 : index
    %235 = vector.load %arg4[%c0_128, %c0_129] : memref<64x256xf32, #tpu.memory_space<vmem>>, vector<64x256xf32>
    %cst_130 = arith.constant dense<0.000000e+00> : vector<1x256xf32>
    %236 = tpu.matmul %229, %235, %cst_130 {dimension_numbers = #tpu.dot_dimension_numbers<[1], [0], [0], [1], [0, 0, 1, 1], [], []>} : vector<1x64xf32>, vector<64x256xf32>, vector<1x256xf32> -> vector<1x256xf32>
    %237 = arith.addf %234, %236 : vector<1x256xf32>
    %238 = math.tanh %237 : vector<1x256xf32>
    %239 = vector.extract_strided_slice %238 {offsets = [0, 0], sizes = [1, 192], strides = [1, 1]} : vector<1x256xf32> to vector<1x192xf32>
    %cst_131 = arith.constant 5.000000e-01 : f32
    %240 = vector.broadcast %cst_131 : f32 to vector<1x192xf32>
    %241 = arith.mulf %240, %239 : vector<1x192xf32>
    %cst_132 = arith.constant 5.000000e-01 : f32
    %242 = vector.broadcast %cst_132 : f32 to vector<1x192xf32>
    %243 = arith.addf %241, %242 : vector<1x192xf32>
    %244 = vector.extract_strided_slice %238 {offsets = [0, 192], sizes = [1, 64], strides = [1, 1]} : vector<1x256xf32> to vector<1x64xf32>
    %245 = vector.extract_strided_slice %243 {offsets = [0, 64], sizes = [1, 64], strides = [1, 1]} : vector<1x192xf32> to vector<1x64xf32>
    %246 = arith.mulf %245, %226 : vector<1x64xf32>
    %247 = vector.extract_strided_slice %243 {offsets = [0, 0], sizes = [1, 64], strides = [1, 1]} : vector<1x192xf32> to vector<1x64xf32>
    %248 = arith.mulf %247, %244 : vector<1x64xf32>
    %249 = arith.addf %246, %248 : vector<1x64xf32>
    %250 = vector.extract_strided_slice %243 {offsets = [0, 128], sizes = [1, 64], strides = [1, 1]} : vector<1x192xf32> to vector<1x64xf32>
    %251 = math.tanh %249 : vector<1x64xf32>
    %252 = arith.mulf %250, %251 : vector<1x64xf32>
    %253 = vector.extract_strided_slice %252 {offsets = [0, 0], sizes = [1, 32], strides = [1, 1]} : vector<1x64xf32> to vector<1x32xf32>
    %c7_133 = arith.constant 7 : index
    %c0_134 = arith.constant 0 : index
    %254 = vector.load %arg11[%c7_133, %c0_134] : memref<8x64xf32, #tpu.memory_space<vmem>>, vector<1x32xf32>
    tpu.vector_store %arg11[%c7_133, %c0_134], %253 {strides = array<i32>} : memref<8x64xf32, #tpu.memory_space<vmem>>, vector<1x32xf32>,
    %255 = vector.extract_strided_slice %252 {offsets = [0, 32], sizes = [1, 32], strides = [1, 1]} : vector<1x64xf32> to vector<1x32xf32>
    %c0_135 = arith.constant 0 : index
    %c32_136 = arith.constant 32 : index
    %256 = vector.load %arg11[%c0_135, %c32_136] : memref<8x64xf32, #tpu.memory_space<vmem>>, vector<1x32xf32>
    tpu.vector_store %arg11[%c0_135, %c32_136], %255 {strides = array<i32>} : memref<8x64xf32, #tpu.memory_space<vmem>>, vector<1x32xf32>,
    %c0_137 = arith.constant 0 : index
    %c0_138 = arith.constant 0 : index
    %257 = vector.load %arg11[%c0_137, %c0_138] : memref<8x64xf32, #tpu.memory_space<vmem>>, vector<8x64xf32>
    %c0_139 = arith.constant 0 : index
    %c0_140 = arith.constant 0 : index
    %258 = vector.load %arg6[%c0_139, %c0_140] : memref<64x8xf32, #tpu.memory_space<vmem>>, vector<64x8xf32>
    %cst_141 = arith.constant dense<0.000000e+00> : vector<8x8xf32>
    %259 = tpu.matmul %257, %258, %cst_141 {dimension_numbers = #tpu.dot_dimension_numbers<[1], [0], [0], [1], [0, 0, 1, 1], [], []>} : vector<8x64xf32>, vector<64x8xf32>, vector<8x8xf32> -> vector<8x8xf32>
    %c0_142 = arith.constant 0 : index
    %c0_143 = arith.constant 0 : index
    %260 = vector.load %arg7[%c0_142, %c0_143] : memref<1x8xf32, #tpu.memory_space<vmem>>, vector<1x8xf32>
    %261 = vector.broadcast %260 : vector<1x8xf32> to vector<8x8xf32>
    %262 = arith.addf %259, %261 : vector<8x8xf32>
    %c0_144 = arith.constant 0 : index
    %c0_145 = arith.constant 0 : index
    %263 = vector.load %arg8[%c0_144, %c0_145] : memref<8x8xf32, #tpu.memory_space<vmem>>, vector<8x8xf32>
    tpu.vector_store %arg8[%c0_144, %c0_145], %262 {strides = array<i32>} : memref<8x8xf32, #tpu.memory_space<vmem>>, vector<8x8xf32>,
    return
  }
  func.func @transform_0(%arg0: i32, %arg1: memref<8xi32, #tpu.memory_space<smem>>) -> (i32, i32) {
    %c0_i32 = arith.constant 0 : i32
    %c0_i32_0 = arith.constant 0 : i32
    %c0_i32_1 = arith.constant 0 : i32
    return %c0_i32, %c0_i32_0 : i32, i32
  }
  func.func @transform_1(%arg0: i32, %arg1: memref<8xi32, #tpu.memory_space<smem>>) -> (i32, i32) {
    %c0_i32 = arith.constant 0 : i32
    %c0_i32_0 = arith.constant 0 : i32
    %c0_i32_1 = arith.constant 0 : i32
    return %c0_i32, %c0_i32_0 : i32, i32
  }
  func.func @transform_2(%arg0: i32, %arg1: memref<8xi32, #tpu.memory_space<smem>>) -> (i32, i32) {
    %c0_i32 = arith.constant 0 : i32
    %c0_i32_0 = arith.constant 0 : i32
    %c0_i32_1 = arith.constant 0 : i32
    return %c0_i32, %c0_i32_0 : i32, i32
  }
  func.func @transform_3(%arg0: i32, %arg1: memref<8xi32, #tpu.memory_space<smem>>) -> (i32, i32) {
    %c0_i32 = arith.constant 0 : i32
    %c0_i32_0 = arith.constant 0 : i32
    %c0_i32_1 = arith.constant 0 : i32
    return %c0_i32, %c0_i32_0 : i32, i32
  }
  func.func @transform_4(%arg0: i32, %arg1: memref<8xi32, #tpu.memory_space<smem>>) -> (i32, i32) {
    %c0_i32 = arith.constant 0 : i32
    %c0_i32_0 = arith.constant 0 : i32
    %c0_i32_1 = arith.constant 0 : i32
    return %c0_i32, %c0_i32_0 : i32, i32
  }
  func.func @transform_5(%arg0: i32, %arg1: memref<8xi32, #tpu.memory_space<smem>>) -> (i32, i32) {
    %c0_i32 = arith.constant 0 : i32
    %c0_i32_0 = arith.constant 0 : i32
    %c0_i32_1 = arith.constant 0 : i32
    return %c0_i32, %c0_i32_0 : i32, i32
  }
  func.func @transform_6(%arg0: i32, %arg1: memref<8xi32, #tpu.memory_space<smem>>) -> (i32, i32) {
    %c0_i32 = arith.constant 0 : i32
    %c0_i32_0 = arith.constant 0 : i32
    %c0_i32_1 = arith.constant 0 : i32
    return %c0_i32, %c0_i32_0 : i32, i32
  }
}

</mosaic_0001>

<llo_original>
// kernel: tpu_custom_call.1
$region0: #{tpu_custom_call.1}
  #allocation0 [shape = 'u32[]', space=smem, size = 0x4, offset = 0x4, fixed_abs, tag = 'smem constant byte address 0x4 - core index']
  #allocation1 [shape = 'u32[72,128]{1,0:T(1,128)}', space=vmem, size = 0x9000, scoped, tag = 'internal scratch']
  #allocation2 [shape = 'f32[8,32]{1,0:T(8,128)}', space=vmem, size = 0x1000, scoped, tag = 'scratch operand']
  #allocation3 [shape = 'f32[8,256]{1,0:T(8,128)}', space=vmem, size = 0x2000, scoped, tag = 'scratch operand']
  #allocation4 [shape = 'f32[8,64]{1,0:T(8,128)}', space=vmem, size = 0x1000, scoped, tag = 'scratch operand']
  #allocation5 [shape = 's32[1]{0}', space=sflag, size = 0x4, scoped, tag = 'scoped memory for tpu_custom_call.1']
  #allocation6 [shape = 'u8[512]{0}', space=smem, size = 0x200, scoped, tag = 'prefetched SMEM operand 0']
  %s0 = inlined_call_operand.vmem [shape: s32[8], index: 0, kind: input, shape index: {}]
  %s1 = inlined_call_operand.vmem [shape: f32[20,16], index: 1, kind: input, shape index: {}]
  %s2 = inlined_call_operand.vmem [shape: f32[32,256], index: 2, kind: input, shape index: {}]
  %s3 = inlined_call_operand.hbm [shape: f32[64,256], index: 3, kind: input, shape index: {}]
  %s4 = inlined_call_operand.vmem [shape: f32[1,256], index: 4, kind: input, shape index: {}]
  %s5 = inlined_call_operand.vmem [shape: f32[64,8], index: 5, kind: input, shape index: {}]
  %s6 = inlined_call_operand.vmem [shape: f32[1,8], index: 6, kind: input, shape index: {}]
  %s7 = inlined_call_operand.hbm [shape: f32[8,8], index: 7, kind: output, shape index: {}]
  %s8 = sld [smem:[#allocation0]]
  $region38: #{tpu_custom_call.1} parent=0
    _
  %s10 = ssub.s32 1, %s8
  %s11 = scalar_select 0, %s10, %s8
  %s13 = sshll.u32 %s0, 4
  %s14 = int_to_ptr.vmem [resolvable:$true] %s13
  %16 = dma.vmem_to_smem %s14, 16, [#allocation6], [#allocation5]
  %18 = dma.done [#allocation5], 16
  %19 = sfence
  $region1: #{tpu_custom_call.1} parent=0
    #allocation7 [shape = 'u8[65536]{0}', space=vmem, size = 0x10000, scoped, tag = 'input window, operand 3, single buffered']
    #allocation8 [shape = 's32[1]{0}', space=sflag, size = 0x4, scoped, tag = 'scoped memory for tpu_custom_call.1']
    #allocation9 [shape = 's32[1]{0}', space=sflag, size = 0x4, scoped, tag = 'scoped memory for tpu_custom_call.1']
    #allocation10 [shape = 'u8[4096]{0}', space=vmem, size = 0x1000, scoped, tag = 'output window, operand 0, single buffered']
    %20 = vsyncpa [#allocation8], 0
    %21 = vsyncpa [#allocation9], 0
    // Predicated region
    $region2: #{tpu_custom_call.1} parent=1 // pred_check
      _
    $region3: #{tpu_custom_call.1} parent=1 // pred_check_branch
      %23 = sbr.rel (0) target = $region5
    $region4: #{tpu_custom_call.1} parent=1 // pred_region
      _
    $region5: #{tpu_custom_call.1} parent=1 // pred_fallthru
      _
    // Predicated region
    $region6: #{tpu_custom_call.1} parent=1 // pred_check
      _
    $region7: #{tpu_custom_call.1} parent=1 // pred_check_branch
      %25 = sbr.rel (0) target = $region9
    $region8: #{tpu_custom_call.1} parent=1 // pred_region
      _
    $region9: #{tpu_custom_call.1} parent=1 // pred_fallthru
      _
    // Predicated region
    $region10: #{tpu_custom_call.1} parent=1 // pred_check
      _
    $region11: #{tpu_custom_call.1} parent=1 // pred_check_branch
      %27 = sbr.rel (0) target = $region13
    $region12: #{tpu_custom_call.1} parent=1 // pred_region
      %29 = vsyncadd [#allocation8], 0
      %s30 = sshll.u32 %s3, 4
      %s31 = int_to_ptr.hbm [resolvable:$true] %s30
      %s32 = sshll.u32 [#allocation7], 4
      %s33 = int_to_ptr.vmem [resolvable:$true] %s32
      %38 = dma.hbm_to_vmem [thread:$0]  %s31, 2048, %s33, [#allocation8], 256, 256, 16
    $region13: #{tpu_custom_call.1} parent=1 // pred_fallthru
      _
    // Predicated region
    $region14: #{tpu_custom_call.1} parent=1 // pred_check
      _
    $region15: #{tpu_custom_call.1} parent=1 // pred_check_branch
      %40 = sbr.rel (0) target = $region17
    $region16: #{tpu_custom_call.1} parent=1 // pred_region
      _
    $region17: #{tpu_custom_call.1} parent=1 // pred_fallthru
      _
    // Predicated region
    $region18: #{tpu_custom_call.1} parent=1 // pred_check
      _
    $region19: #{tpu_custom_call.1} parent=1 // pred_check_branch
      %42 = sbr.rel (0) target = $region21
    $region20: #{tpu_custom_call.1} parent=1 // pred_region
      _
    $region21: #{tpu_custom_call.1} parent=1 // pred_fallthru
      _
    // Predicated region
    $region22: #{tpu_custom_call.1} parent=1 // pred_check
      _
    $region23: #{tpu_custom_call.1} parent=1 // pred_check_branch
      %44 = sbr.rel (0) target = $region25
    $region24: #{tpu_custom_call.1} parent=1 // pred_region
      _
    $region25: #{tpu_custom_call.1} parent=1 // pred_fallthru
      _
    // Predicated region
    $region26: #{tpu_custom_call.1} parent=1 // pred_check
      _
    $region27: #{tpu_custom_call.1} parent=1 // pred_check_branch
      %46 = sbr.rel (0) target = $region29
    $region28: #{tpu_custom_call.1} parent=1 // pred_region
      %48 = dma.done [#allocation8], 2048
    $region29: #{tpu_custom_call.1} parent=1 // pred_fallthru
      _
    %s49 = sld [smem:[#allocation6]]
    %s50 = scalar_lea.vmem %s1, %s49
    %v51 = vld [vmem:[%s50] sm:$0x1]
    %s52 = sld [smem:[#allocation6 + $0x7]]
    %s53 = scalar_lea.vmem %s1, %s52
    %v54 = vld [vmem:[%s53] sm:$0x1]
    %56 = vrot.lane.b32.xlu0 %v54, 16
    %v57 = vpop.permute.xlu0 %56
    %vm59 = vcmask 130048
    %v60 = vsel %vm59, %v51, %v57
    %vm61 = vcmask 253952
    %62 = vst.msk [vmem:[#allocation2] sm:$0x1] %vm61, %v60
    %s63 = sld [smem:[#allocation6 + $0x1]]
    %s64 = scalar_lea.vmem %s1, %s63
    %v65 = vld [vmem:[%s64] sm:$0x1]
    %s66 = sld [smem:[#allocation6 + $0x6]]
    %s67 = scalar_lea.vmem %s1, %s66
    %v68 = vld [vmem:[%s67] sm:$0x1]
    %70 = vrot.lane.b32.xlu0 %v68, 16
    %v71 = vpop.permute.xlu0 %70
    %v73 = vsel %vm59, %v65, %v71
    %74 = vst.msk [vmem:[#allocation2 + $0x1] sm:$0x1] %vm61, %v73
    %s75 = sld [smem:[#allocation6 + $0x2]]
    %s76 = scalar_lea.vmem %s1, %s75
    %v77 = vld [vmem:[%s76] sm:$0x1]
    %s78 = sld [smem:[#allocation6 + $0x5]]
    %s79 = scalar_lea.vmem %s1, %s78
    %v80 = vld [vmem:[%s79] sm:$0x1]
    %82 = vrot.lane.b32.xlu0 %v80, 16
    %v83 = vpop.permute.xlu0 %82
    %v85 = vsel %vm59, %v77, %v83
    %86 = vst.msk [vmem:[#allocation2 + $0x2] sm:$0x1] %vm61, %v85
    %s87 = sld [smem:[#allocation6 + $0x3]]
    %s88 = scalar_lea.vmem %s1, %s87
    %v89 = vld [vmem:[%s88] sm:$0x1]
    %s90 = sld [smem:[#allocation6 + $0x4]]
    %s91 = scalar_lea.vmem %s1, %s90
    %v92 = vld [vmem:[%s91] sm:$0x1]
    %94 = vrot.lane.b32.xlu0 %v92, 16
    %v95 = vpop.permute.xlu0 %94
    %v97 = vsel %vm59, %v89, %v95
    %98 = vst.msk [vmem:[#allocation2 + $0x3] sm:$0x1] %vm61, %v97
    %s99 = sld [smem:[#allocation6 + $0x4]]
    %s100 = scalar_lea.vmem %s1, %s99
    %v101 = vld [vmem:[%s100] sm:$0x1]
    %s102 = sld [smem:[#allocation6 + $0x3]]
    %s103 = scalar_lea.vmem %s1, %s102
    %v104 = vld [vmem:[%s103] sm:$0x1]
    %106 = vrot.lane.b32.xlu0 %v104, 16
    %v107 = vpop.permute.xlu0 %106
    %v109 = vsel %vm59, %v101, %v107
    %110 = vst.msk [vmem:[#allocation2 + $0x4] sm:$0x1] %vm61, %v109
    %s111 = sld [smem:[#allocation6 + $0x5]]
    %s112 = scalar_lea.vmem %s1, %s111
    %v113 = vld [vmem:[%s112] sm:$0x1]
    %s114 = sld [smem:[#allocation6 + $0x2]]
    %s115 = scalar_lea.vmem %s1, %s114
    %v116 = vld [vmem:[%s115] sm:$0x1]
    %118 = vrot.lane.b32.xlu0 %v116, 16
    %v119 = vpop.permute.xlu0 %118
    %v121 = vsel %vm59, %v113, %v119
    %122 = vst.msk [vmem:[#allocation2 + $0x5] sm:$0x1] %vm61, %v121
    %s123 = sld [smem:[#allocation6 + $0x6]]
    %s124 = scalar_lea.vmem %s1, %s123
    %v125 = vld [vmem:[%s124] sm:$0x1]
    %s126 = sld [smem:[#allocation6 + $0x1]]
    %s127 = scalar_lea.vmem %s1, %s126
    %v128 = vld [vmem:[%s127] sm:$0x1]
    %130 = vrot.lane.b32.xlu0 %v128, 16
    %v131 = vpop.permute.xlu0 %130
    %v133 = vsel %vm59, %v125, %v131
    %134 = vst.msk [vmem:[#allocation2 + $0x6] sm:$0x1] %vm61, %v133
    %s135 = sld [smem:[#allocation6 + $0x7]]
    %s136 = scalar_lea.vmem %s1, %s135
    %v137 = vld [vmem:[%s136] sm:$0x1]
    %s138 = sld [smem:[#allocation6]]
    %s139 = scalar_lea.vmem %s1, %s138
    %v140 = vld [vmem:[%s139] sm:$0x1]
    %142 = vrot.lane.b32.xlu0 %v140, 16
    %v143 = vpop.permute.xlu0 %142
    %v145 = vsel %vm59, %v137, %v143
    %146 = vst.msk [vmem:[#allocation2 + $0x7] sm:$0x1] %vm61, %v145
    %v147 = vld [vmem:[#allocation2] sm:$0xff]
    %v148 = vld [vmem:[%s2] sm:$0xff]
    %v149 = vld [vmem:[%s2 + $0x8] sm:$0xff]
    %v150 = vld [vmem:[%s2 + $0x10] sm:$0xff]
    %v151 = vld [vmem:[%s2 + $0x18] sm:$0xff]
    %v152 = vld [vmem:[%s2 + $0x20] sm:$0xff]
    %v153 = vld [vmem:[%s2 + $0x28] sm:$0xff]
    %v154 = vld [vmem:[%s2 + $0x30] sm:$0xff]
    %v155 = vld [vmem:[%s2 + $0x38] sm:$0xff]
    %v156 = vld [vmem:[%s4] sm:$0x3]
    %v158 = vperm.slane %v156, 0
    %v159 = vperm.slane %v156, 1
    %vm162 = vcmask 261120
    %v164 = vsel %vm162, %v147, 0
    %166 = vmatpush.msra.mxu0 0.0
    %167 = vmatpush.msra.mxu0 0.0
    %168 = vmatpush.msra.mxu0 0.0
    %169 = vmatpush.msra.mxu0 0.0
    %170 = vmatpush.msra.mxu0 0.0
    %171 = vmatpush.msra.mxu0 0.0
    %172 = vmatpush.msra.mxu0 0.0
    %173 = vmatpush.msra.mxu0 0.0
    %174 = vmatpush.msra.mxu0 0.0
    %175 = vmatpush.msra.mxu0 0.0
    %176 = vmatpush.msra.mxu0 0.0
    %177 = vmatpush.msra.mxu0 0.0
    %178 = vmatpush.msra.mxu0 %v154
    %179 = vmatpush.msra.mxu0 %v152
    %180 = vmatpush.msra.mxu0 %v150
    %181 = vmatpush.msra.mxu0 %v148
    %182 = vmatmul.f32.gmra.mxu0 %v164
    %v183 = vpop.f32.mrf.mxu0
    %v184 = vadd.f32 %v158, %v183
    %185 = vdwg.mxu0
    %186 = vmatpush.msra.mxu0 0.0
    %187 = vmatpush.msra.mxu0 0.0
    %188 = vmatpush.msra.mxu0 0.0
    %189 = vmatpush.msra.mxu0 0.0
    %190 = vmatpush.msra.mxu0 0.0
    %191 = vmatpush.msra.mxu0 0.0
    %192 = vmatpush.msra.mxu0 0.0
    %193 = vmatpush.msra.mxu0 0.0
    %194 = vmatpush.msra.mxu0 0.0
    %195 = vmatpush.msra.mxu0 0.0
    %196 = vmatpush.msra.mxu0 0.0
    %197 = vmatpush.msra.mxu0 0.0
    %198 = vmatpush.msra.mxu0 %v155
    %199 = vmatpush.msra.mxu0 %v153
    %200 = vmatpush.msra.mxu0 %v151
    %201 = vmatpush.msra.mxu0 %v149
    %202 = vmatmul.f32.gmra.mxu0 %v164
    %v203 = vpop.f32.mrf.mxu0
    %v204 = vadd.f32 %v159, %v203
    %205 = vdwg.mxu0
    %206 = vst [vmem:[#allocation3] sm:$0xff] %v184
    %207 = vst [vmem:[#allocation3 + $0x8] sm:$0xff] %v204
    %v208 = vld [vmem:[#allocation3] ss:$8 sm:$0x3]
    %v209 = vld [vmem:[#allocation7] sm:$0xff]
    %v210 = vld [vmem:[#allocation7 + $0x8] sm:$0xff]
    %v211 = vld [vmem:[#allocation7 + $0x10] sm:$0xff]
    %v212 = vld [vmem:[#allocation7 + $0x18] sm:$0xff]
    %v213 = vld [vmem:[#allocation7 + $0x20] sm:$0xff]
    %v214 = vld [vmem:[#allocation7 + $0x28] sm:$0xff]
    %v215 = vld [vmem:[#allocation7 + $0x30] sm:$0xff]
    %v216 = vld [vmem:[#allocation7 + $0x38] sm:$0xff]
    %v217 = vld [vmem:[#allocation7 + $0x40] sm:$0xff]
    %v218 = vld [vmem:[#allocation7 + $0x48] sm:$0xff]
    %v219 = vld [vmem:[#allocation7 + $0x50] sm:$0xff]
    %v220 = vld [vmem:[#allocation7 + $0x58] sm:$0xff]
    %v221 = vld [vmem:[#allocation7 + $0x60] sm:$0xff]
    %v222 = vld [vmem:[#allocation7 + $0x68] sm:$0xff]
    %v223 = vld [vmem:[#allocation7 + $0x70] sm:$0xff]
    %v224 = vld [vmem:[#allocation7 + $0x78] sm:$0xff]
    %vm225 = vcmask 523264
    %v227 = vsel %vm225, 0.0, 0
    %229 = vmatpush.msra.mxu0 0.0
    %230 = vmatpush.msra.mxu0 0.0
    %231 = vmatpush.msra.mxu0 0.0
    %232 = vmatpush.msra.mxu0 0.0
    %233 = vmatpush.msra.mxu0 0.0
    %234 = vmatpush.msra.mxu0 0.0
    %235 = vmatpush.msra.mxu0 0.0
    %236 = vmatpush.msra.mxu0 0.0
    %237 = vmatpush.msra.mxu0 %v223
    %238 = vmatpush.msra.mxu0 %v221
    %239 = vmatpush.msra.mxu0 %v219
    %240 = vmatpush.msra.mxu0 %v217
    %241 = vmatpush.msra.mxu0 %v215
    %242 = vmatpush.msra.mxu0 %v213
    %243 = vmatpush.msra.mxu0 %v211
    %244 = vmatpush.msra.mxu0 %v209
    %245 = vmatmul.f32.gmra.mxu0 %v227
    %v246 = vpop.f32.mrf.mxu0
    %v247 = vadd.f32 0.0, %v246
    %248 = vdwg.mxu0
    %249 = vmatpush.msra.mxu0 0.0
    %250 = vmatpush.msra.mxu0 0.0
    %251 = vmatpush.msra.mxu0 0.0
    %252 = vmatpush.msra.mxu0 0.0
    %253 = vmatpush.msra.mxu0 0.0
    %254 = vmatpush.msra.mxu0 0.0
    %255 = vmatpush.msra.mxu0 0.0
    %256 = vmatpush.msra.mxu0 0.0
    %257 = vmatpush.msra.mxu0 %v224
    %258 = vmatpush.msra.mxu0 %v222
    %259 = vmatpush.msra.mxu0 %v220
    %260 = vmatpush.msra.mxu0 %v218
    %261 = vmatpush.msra.mxu0 %v216
    %262 = vmatpush.msra.mxu0 %v214
    %263 = vmatpush.msra.mxu0 %v212
    %264 = vmatpush.msra.mxu0 %v210
    %265 = vmatmul.f32.gmra.mxu0 %v227
    %v266 = vpop.f32.mrf.mxu0
    %v267 = vadd.f32 0.0, %v266
    %268 = vdwg.mxu0
    %v271 = vrot.slane %v267, 7
    %vm272 = vcmask 1040384
    %v273 = vsel %vm272, %v247, %v271
    %v275 = vadd.f32 %v208, %v273
    %v276 = vtanh.pop %v275
    %v277 = vmul.f32 %v276, 0.5
    %v278 = vadd.f32 %v277, 0.5
    %v279 = vmul.f32 %v278, 0.0
    %281 = vrot.lane.b32.xlu0 %v276, 64
    %v282 = vpop.permute.xlu0 %281
    %v283 = vrot.slane %v282, 1
    %v285 = vmul.f32 %v278, %v283
    %287 = vrot.lane.b32.xlu0 %v285, 64
    %v288 = vpop.permute.xlu0 %287
    %v290 = vadd.f32 %v279, %v288
    %v291 = vtanh.pop %v290
    %v293 = vrot.slane %v278, 1
    %296 = vrot.lane.b32.xlu0 %v291, 64
    %v297 = vpop.permute.xlu0 %296
    %v299 = vmul.f32 %v293, %v297
    %300 = vst.msk [vmem:[#allocation4] sm:$0x1] %vm61, %v299
    %vm301 = vcmask 516352
    %302 = vst.msk [vmem:[#allocation4 + $0x7] sm:$0x1] %vm301, %v299
    %s303 = scalar_lea.vmem [#allocation3], 1
    %v304 = vld [vmem:[%s303] ss:$8 sm:$0x3]
    %v305 = vld [vmem:[#allocation7] sm:$0xff]
    %v306 = vld [vmem:[#allocation7 + $0x8] sm:$0xff]
    %v307 = vld [vmem:[#allocation7 + $0x10] sm:$0xff]
    %v308 = vld [vmem:[#allocation7 + $0x18] sm:$0xff]
    %v309 = vld [vmem:[#allocation7 + $0x20] sm:$0xff]
    %v310 = vld [vmem:[#allocation7 + $0x28] sm:$0xff]
    %v311 = vld [vmem:[#allocation7 + $0x30] sm:$0xff]
    %v312 = vld [vmem:[#allocation7 + $0x38] sm:$0xff]
    %v313 = vld [vmem:[#allocation7 + $0x40] sm:$0xff]
    %v314 = vld [vmem:[#allocation7 + $0x48] sm:$0xff]
    %v315 = vld [vmem:[#allocation7 + $0x50] sm:$0xff]
    %v316 = vld [vmem:[#allocation7 + $0x58] sm:$0xff]
    %v317 = vld [vmem:[#allocation7 + $0x60] sm:$0xff]
    %v318 = vld [vmem:[#allocation7 + $0x68] sm:$0xff]
    %v319 = vld [vmem:[#allocation7 + $0x70] sm:$0xff]
    %v320 = vld [vmem:[#allocation7 + $0x78] sm:$0xff]
    %v322 = vsel %vm225, %v299, 0
    %324 = vmatpush.msra.mxu0 0.0
    %325 = vmatpush.msra.mxu0 0.0
    %326 = vmatpush.msra.mxu0 0.0
    %327 = vmatpush.msra.mxu0 0.0
    %328 = vmatpush.msra.mxu0 0.0
    %329 = vmatpush.msra.mxu0 0.0
    %330 = vmatpush.msra.mxu0 0.0
    %331 = vmatpush.msra.mxu0 0.0
    %332 = vmatpush.msra.mxu0 %v319
    %333 = vmatpush.msra.mxu0 %v317
    %334 = vmatpush.msra.mxu0 %v315
    %335 = vmatpush.msra.mxu0 %v313
    %336 = vmatpush.msra.mxu0 %v311
    %337 = vmatpush.msra.mxu0 %v309
    %338 = vmatpush.msra.mxu0 %v307
    %339 = vmatpush.msra.mxu0 %v305
    %340 = vmatmul.f32.gmra.mxu0 %v322
    %v341 = vpop.f32.mrf.mxu0
    %v342 = vadd.f32 0.0, %v341
    %343 = vdwg.mxu0
    %344 = vmatpush.msra.mxu0 0.0
    %345 = vmatpush.msra.mxu0 0.0
    %346 = vmatpush.msra.mxu0 0.0
    %347 = vmatpush.msra.mxu0 0.0
    %348 = vmatpush.msra.mxu0 0.0
    %349 = vmatpush.msra.mxu0 0.0
    %350 = vmatpush.msra.mxu0 0.0
    %351 = vmatpush.msra.mxu0 0.0
    %352 = vmatpush.msra.mxu0 %v320
    %353 = vmatpush.msra.mxu0 %v318
    %354 = vmatpush.msra.mxu0 %v316
    %355 = vmatpush.msra.mxu0 %v314
    %356 = vmatpush.msra.mxu0 %v312
    %357 = vmatpush.msra.mxu0 %v310
    %358 = vmatpush.msra.mxu0 %v308
    %359 = vmatpush.msra.mxu0 %v306
    %360 = vmatmul.f32.gmra.mxu0 %v322
    %v361 = vpop.f32.mrf.mxu0
    %v362 = vadd.f32 0.0, %v361
    %363 = vdwg.mxu0
    %v366 = vrot.slane %v362, 7
    %v367 = vsel %vm272, %v342, %v366
    %v369 = vadd.f32 %v304, %v367
    %v370 = vtanh.pop %v369
    %v371 = vmul.f32 %v370, 0.5
    %v372 = vadd.f32 %v371, 0.5
    %v373 = vmul.f32 %v372, %v290
    %375 = vrot.lane.b32.xlu0 %v370, 64
    %v376 = vpop.permute.xlu0 %375
    %v377 = vrot.slane %v376, 1
    %v379 = vmul.f32 %v372, %v377
    %381 = vrot.lane.b32.xlu0 %v379, 64
    %v382 = vpop.permute.xlu0 %381
    %v384 = vadd.f32 %v373, %v382
    %v385 = vtanh.pop %v384
    %v387 = vrot.slane %v372, 1
    %390 = vrot.lane.b32.xlu0 %v385, 64
    %v391 = vpop.permute.xlu0 %390
    %v393 = vmul.f32 %v387, %v391
    %394 = vst.msk [vmem:[#allocation4 + $0x1] sm:$0x1] %vm61, %v393
    %395 = vst.msk [vmem:[#allocation4 + $0x6] sm:$0x1] %vm301, %v393
    %s396 = scalar_lea.vmem [#allocation3], 2
    %v397 = vld [vmem:[%s396] ss:$8 sm:$0x3]
    %v398 = vld [vmem:[#allocation7] sm:$0xff]
    %v399 = vld [vmem:[#allocation7 + $0x8] sm:$0xff]
    %v400 = vld [vmem:[#allocation7 + $0x10] sm:$0xff]
    %v401 = vld [vmem:[#allocation7 + $0x18] sm:$0xff]
    %v402 = vld [vmem:[#allocation7 + $0x20] sm:$0xff]
    %v403 = vld [vmem:[#allocation7 + $0x28] sm:$0xff]
    %v404 = vld [vmem:[#allocation7 + $0x30] sm:$0xff]
    %v405 = vld [vmem:[#allocation7 + $0x38] sm:$0xff]
    %v406 = vld [vmem:[#allocation7 + $0x40] sm:$0xff]
    %v407 = vld [vmem:[#allocation7 + $0x48] sm:$0xff]
    %v408 = vld [vmem:[#allocation7 + $0x50] sm:$0xff]
    %v409 = vld [vmem:[#allocation7 + $0x58] sm:$0xff]
    %v410 = vld [vmem:[#allocation7 + $0x60] sm:$0xff]
    %v411 = vld [vmem:[#allocation7 + $0x68] sm:$0xff]
    %v412 = vld [vmem:[#allocation7 + $0x70] sm:$0xff]
    %v413 = vld [vmem:[#allocation7 + $0x78] sm:$0xff]
    %v415 = vsel %vm225, %v393, 0
    %417 = vmatpush.msra.mxu0 0.0
    %418 = vmatpush.msra.mxu0 0.0
    %419 = vmatpush.msra.mxu0 0.0
    %420 = vmatpush.msra.mxu0 0.0
    %421 = vmatpush.msra.mxu0 0.0
    %422 = vmatpush.msra.mxu0 0.0
    %423 = vmatpush.msra.mxu0 0.0
    %424 = vmatpush.msra.mxu0 0.0
    %425 = vmatpush.msra.mxu0 %v412
    %426 = vmatpush.msra.mxu0 %v410
    %427 = vmatpush.msra.mxu0 %v408
    %428 = vmatpush.msra.mxu0 %v406
    %429 = vmatpush.msra.mxu0 %v404
    %430 = vmatpush.msra.mxu0 %v402
    %431 = vmatpush.msra.mxu0 %v400
    %432 = vmatpush.msra.mxu0 %v398
    %433 = vmatmul.f32.gmra.mxu0 %v415
    %v434 = vpop.f32.mrf.mxu0
    %v435 = vadd.f32 0.0, %v434
    %436 = vdwg.mxu0
    %437 = vmatpush.msra.mxu0 0.0
    %438 = vmatpush.msra.mxu0 0.0
    %439 = vmatpush.msra.mxu0 0.0
    %440 = vmatpush.msra.mxu0 0.0
    %441 = vmatpush.msra.mxu0 0.0
    %442 = vmatpush.msra.mxu0 0.0
    %443 = vmatpush.msra.mxu0 0.0
    %444 = vmatpush.msra.mxu0 0.0
    %445 = vmatpush.msra.mxu0 %v413
    %446 = vmatpush.msra.mxu0 %v411
    %447 = vmatpush.msra.mxu0 %v409
    %448 = vmatpush.msra.mxu0 %v407
    %449 = vmatpush.msra.mxu0 %v405
    %450 = vmatpush.msra.mxu0 %v403
    %451 = vmatpush.msra.mxu0 %v401
    %452 = vmatpush.msra.mxu0 %v399
    %453 = vmatmul.f32.gmra.mxu0 %v415
    %v454 = vpop.f32.mrf.mxu0
    %v455 = vadd.f32 0.0, %v454
    %456 = vdwg.mxu0
    %v459 = vrot.slane %v455, 7
    %v460 = vsel %vm272, %v435, %v459
    %v462 = vadd.f32 %v397, %v460
    %v463 = vtanh.pop %v462
    %v464 = vmul.f32 %v463, 0.5
    %v465 = vadd.f32 %v464, 0.5
    %v466 = vmul.f32 %v465, %v384
    %468 = vrot.lane.b32.xlu0 %v463, 64
    %v469 = vpop.permute.xlu0 %468
    %v470 = vrot.slane %v469, 1
    %v472 = vmul.f32 %v465, %v470
    %474 = vrot.lane.b32.xlu0 %v472, 64
    %v475 = vpop.permute.xlu0 %474
    %v477 = vadd.f32 %v466, %v475
    %v478 = vtanh.pop %v477
    %v480 = vrot.slane %v465, 1
    %483 = vrot.lane.b32.xlu0 %v478, 64
    %v484 = vpop.permute.xlu0 %483
    %v486 = vmul.f32 %v480, %v484
    %487 = vst.msk [vmem:[#allocation4 + $0x2] sm:$0x1] %vm61, %v486
    %488 = vst.msk [vmem:[#allocation4 + $0x5] sm:$0x1] %vm301, %v486
    %s489 = scalar_lea.vmem [#allocation3], 3
    %v490 = vld [vmem:[%s489] ss:$8 sm:$0x3]
    %v491 = vld [vmem:[#allocation7] sm:$0xff]
    %v492 = vld [vmem:[#allocation7 + $0x8] sm:$0xff]
    %v493 = vld [vmem:[#allocation7 + $0x10] sm:$0xff]
    %v494 = vld [vmem:[#allocation7 + $0x18] sm:$0xff]
    %v495 = vld [vmem:[#allocation7 + $0x20] sm:$0xff]
    %v496 = vld [vmem:[#allocation7 + $0x28] sm:$0xff]
    %v497 = vld [vmem:[#allocation7 + $0x30] sm:$0xff]
    %v498 = vld [vmem:[#allocation7 + $0x38] sm:$0xff]
    %v499 = vld [vmem:[#allocation7 + $0x40] sm:$0xff]
    %v500 = vld [vmem:[#allocation7 + $0x48] sm:$0xff]
    %v501 = vld [vmem:[#allocation7 + $0x50] sm:$0xff]
    %v502 = vld [vmem:[#allocation7 + $0x58] sm:$0xff]
    %v503 = vld [vmem:[#allocation7 + $0x60] sm:$0xff]
    %v504 = vld [vmem:[#allocation7 + $0x68] sm:$0xff]
    %v505 = vld [vmem:[#allocation7 + $0x70] sm:$0xff]
    %v506 = vld [vmem:[#allocation7 + $0x78] sm:$0xff]
    %v508 = vsel %vm225, %v486, 0
    %510 = vmatpush.msra.mxu0 0.0
    %511 = vmatpush.msra.mxu0 0.0
    %512 = vmatpush.msra.mxu0 0.0
    %513 = vmatpush.msra.mxu0 0.0
    %514 = vmatpush.msra.mxu0 0.0
    %515 = vmatpush.msra.mxu0 0.0
    %516 = vmatpush.msra.mxu0 0.0
    %517 = vmatpush.msra.mxu0 0.0
    %518 = vmatpush.msra.mxu0 %v505
    %519 = vmatpush.msra.mxu0 %v503
    %520 = vmatpush.msra.mxu0 %v501
    %521 = vmatpush.msra.mxu0 %v499
    %522 = vmatpush.msra.mxu0 %v497
    %523 = vmatpush.msra.mxu0 %v495
    %524 = vmatpush.msra.mxu0 %v493
    %525 = vmatpush.msra.mxu0 %v491
    %526 = vmatmul.f32.gmra.mxu0 %v508
    %v527 = vpop.f32.mrf.mxu0
    %v528 = vadd.f32 0.0, %v527
    %529 = vdwg.mxu0
    %530 = vmatpush.msra.mxu0 0.0
    %531 = vmatpush.msra.mxu0 0.0
    %532 = vmatpush.msra.mxu0 0.0
    %533 = vmatpush.msra.mxu0 0.0
    %534 = vmatpush.msra.mxu0 0.0
    %535 = vmatpush.msra.mxu0 0.0
    %536 = vmatpush.msra.mxu0 0.0
    %537 = vmatpush.msra.mxu0 0.0
    %538 = vmatpush.msra.mxu0 %v506
    %539 = vmatpush.msra.mxu0 %v504
    %540 = vmatpush.msra.mxu0 %v502
    %541 = vmatpush.msra.mxu0 %v500
    %542 = vmatpush.msra.mxu0 %v498
    %543 = vmatpush.msra.mxu0 %v496
    %544 = vmatpush.msra.mxu0 %v494
    %545 = vmatpush.msra.mxu0 %v492
    %546 = vmatmul.f32.gmra.mxu0 %v508
    %v547 = vpop.f32.mrf.mxu0
    %v548 = vadd.f32 0.0, %v547
    %549 = vdwg.mxu0
    %v552 = vrot.slane %v548, 7
    %v553 = vsel %vm272, %v528, %v552
    %v555 = vadd.f32 %v490, %v553
    %v556 = vtanh.pop %v555
    %v557 = vmul.f32 %v556, 0.5
    %v558 = vadd.f32 %v557, 0.5
    %v559 = vmul.f32 %v558, %v477
    %561 = vrot.lane.b32.xlu0 %v556, 64
    %v562 = vpop.permute.xlu0 %561
    %v563 = vrot.slane %v562, 1
    %v565 = vmul.f32 %v558, %v563
    %567 = vrot.lane.b32.xlu0 %v565, 64
    %v568 = vpop.permute.xlu0 %567
    %v570 = vadd.f32 %v559, %v568
    %v571 = vtanh.pop %v570
    %v573 = vrot.slane %v558, 1
    %576 = vrot.lane.b32.xlu0 %v571, 64
    %v577 = vpop.permute.xlu0 %576
    %v579 = vmul.f32 %v573, %v577
    %580 = vst.msk [vmem:[#allocation4 + $0x3] sm:$0x1] %vm61, %v579
    %581 = vst.msk [vmem:[#allocation4 + $0x4] sm:$0x1] %vm301, %v579
    %s582 = scalar_lea.vmem [#allocation3], 4
    %v583 = vld [vmem:[%s582] ss:$8 sm:$0x3]
    %v584 = vld [vmem:[#allocation7] sm:$0xff]
    %v585 = vld [vmem:[#allocation7 + $0x8] sm:$0xff]
    %v586 = vld [vmem:[#allocation7 + $0x10] sm:$0xff]
    %v587 = vld [vmem:[#allocation7 + $0x18] sm:$0xff]
    %v588 = vld [vmem:[#allocation7 + $0x20] sm:$0xff]
    %v589 = vld [vmem:[#allocation7 + $0x28] sm:$0xff]
    %v590 = vld [vmem:[#allocation7 + $0x30] sm:$0xff]
    %v591 = vld [vmem:[#allocation7 + $0x38] sm:$0xff]
    %v592 = vld [vmem:[#allocation7 + $0x40] sm:$0xff]
    %v593 = vld [vmem:[#allocation7 + $0x48] sm:$0xff]
    %v594 = vld [vmem:[#allocation7 + $0x50] sm:$0xff]
    %v595 = vld [vmem:[#allocation7 + $0x58] sm:$0xff]
    %v596 = vld [vmem:[#allocation7 + $0x60] sm:$0xff]
    %v597 = vld [vmem:[#allocation7 + $0x68] sm:$0xff]
    %v598 = vld [vmem:[#allocation7 + $0x70] sm:$0xff]
    %v599 = vld [vmem:[#allocation7 + $0x78] sm:$0xff]
    %v601 = vsel %vm225, %v579, 0
    %603 = vmatpush.msra.mxu0 0.0
    %604 = vmatpush.msra.mxu0 0.0
    %605 = vmatpush.msra.mxu0 0.0
    %606 = vmatpush.msra.mxu0 0.0
    %607 = vmatpush.msra.mxu0 0.0
    %608 = vmatpush.msra.mxu0 0.0
    %609 = vmatpush.msra.mxu0 0.0
    %610 = vmatpush.msra.mxu0 0.0
    %611 = vmatpush.msra.mxu0 %v598
    %612 = vmatpush.msra.mxu0 %v596
    %613 = vmatpush.msra.mxu0 %v594
    %614 = vmatpush.msra.mxu0 %v592
    %615 = vmatpush.msra.mxu0 %v590
    %616 = vmatpush.msra.mxu0 %v588
    %617 = vmatpush.msra.mxu0 %v586
    %618 = vmatpush.msra.mxu0 %v584
    %619 = vmatmul.f32.gmra.mxu0 %v601
    %v620 = vpop.f32.mrf.mxu0
    %v621 = vadd.f32 0.0, %v620
    %622 = vdwg.mxu0
    %623 = vmatpush.msra.mxu0 0.0
    %624 = vmatpush.msra.mxu0 0.0
    %625 = vmatpush.msra.mxu0 0.0
    %626 = vmatpush.msra.mxu0 0.0
    %627 = vmatpush.msra.mxu0 0.0
    %628 = vmatpush.msra.mxu0 0.0
    %629 = vmatpush.msra.mxu0 0.0
    %630 = vmatpush.msra.mxu0 0.0
    %631 = vmatpush.msra.mxu0 %v599
    %632 = vmatpush.msra.mxu0 %v597
    %633 = vmatpush.msra.mxu0 %v595
    %634 = vmatpush.msra.mxu0 %v593
    %635 = vmatpush.msra.mxu0 %v591
    %636 = vmatpush.msra.mxu0 %v589
    %637 = vmatpush.msra.mxu0 %v587
    %638 = vmatpush.msra.mxu0 %v585
    %639 = vmatmul.f32.gmra.mxu0 %v601
    %v640 = vpop.f32.mrf.mxu0
    %v641 = vadd.f32 0.0, %v640
    %642 = vdwg.mxu0
    %v645 = vrot.slane %v641, 7
    %v646 = vsel %vm272, %v621, %v645
    %v648 = vadd.f32 %v583, %v646
    %v649 = vtanh.pop %v648
    %v650 = vmul.f32 %v649, 0.5
    %v651 = vadd.f32 %v650, 0.5
    %v652 = vmul.f32 %v651, %v570
    %654 = vrot.lane.b32.xlu0 %v649, 64
    %v655 = vpop.permute.xlu0 %654
    %v656 = vrot.slane %v655, 1
    %v658 = vmul.f32 %v651, %v656
    %660 = vrot.lane.b32.xlu0 %v658, 64
    %v661 = vpop.permute.xlu0 %660
    %v663 = vadd.f32 %v652, %v661
    %v664 = vtanh.pop %v663
    %v666 = vrot.slane %v651, 1
    %669 = vrot.lane.b32.xlu0 %v664, 64
    %v670 = vpop.permute.xlu0 %669
    %v672 = vmul.f32 %v666, %v670
    %673 = vst.msk [vmem:[#allocation4 + $0x4] sm:$0x1] %vm61, %v672
    %674 = vst.msk [vmem:[#allocation4 + $0x3] sm:$0x1] %vm301, %v672
    %s675 = scalar_lea.vmem [#allocation3], 5
    %v676 = vld [vmem:[%s675] ss:$8 sm:$0x3]
    %v677 = vld [vmem:[#allocation7] sm:$0xff]
    %v678 = vld [vmem:[#allocation7 + $0x8] sm:$0xff]
    %v679 = vld [vmem:[#allocation7 + $0x10] sm:$0xff]
    %v680 = vld [vmem:[#allocation7 + $0x18] sm:$0xff]
    %v681 = vld [vmem:[#allocation7 + $0x20] sm:$0xff]
    %v682 = vld [vmem:[#allocation7 + $0x28] sm:$0xff]
    %v683 = vld [vmem:[#allocation7 + $0x30] sm:$0xff]
    %v684 = vld [vmem:[#allocation7 + $0x38] sm:$0xff]
    %v685 = vld [vmem:[#allocation7 + $0x40] sm:$0xff]
    %v686 = vld [vmem:[#allocation7 + $0x48] sm:$0xff]
    %v687 = vld [vmem:[#allocation7 + $0x50] sm:$0xff]
    %v688 = vld [vmem:[#allocation7 + $0x58] sm:$0xff]
    %v689 = vld [vmem:[#allocation7 + $0x60] sm:$0xff]
    %v690 = vld [vmem:[#allocation7 + $0x68] sm:$0xff]
    %v691 = vld [vmem:[#allocation7 + $0x70] sm:$0xff]
    %v692 = vld [vmem:[#allocation7 + $0x78] sm:$0xff]
    %v694 = vsel %vm225, %v672, 0
    %696 = vmatpush.msra.mxu0 0.0
    %697 = vmatpush.msra.mxu0 0.0
    %698 = vmatpush.msra.mxu0 0.0
    %699 = vmatpush.msra.mxu0 0.0
    %700 = vmatpush.msra.mxu0 0.0
    %701 = vmatpush.msra.mxu0 0.0
    %702 = vmatpush.msra.mxu0 0.0
    %703 = vmatpush.msra.mxu0 0.0
    %704 = vmatpush.msra.mxu0 %v691
    %705 = vmatpush.msra.mxu0 %v689
    %706 = vmatpush.msra.mxu0 %v687
    %707 = vmatpush.msra.mxu0 %v685
    %708 = vmatpush.msra.mxu0 %v683
    %709 = vmatpush.msra.mxu0 %v681
    %710 = vmatpush.msra.mxu0 %v679
    %711 = vmatpush.msra.mxu0 %v677
    %712 = vmatmul.f32.gmra.mxu0 %v694
    %v713 = vpop.f32.mrf.mxu0
    %v714 = vadd.f32 0.0, %v713
    %715 = vdwg.mxu0
    %716 = vmatpush.msra.mxu0 0.0
    %717 = vmatpush.msra.mxu0 0.0
    %718 = vmatpush.msra.mxu0 0.0
    %719 = vmatpush.msra.mxu0 0.0
    %720 = vmatpush.msra.mxu0 0.0
    %721 = vmatpush.msra.mxu0 0.0
    %722 = vmatpush.msra.mxu0 0.0
    %723 = vmatpush.msra.mxu0 0.0
    %724 = vmatpush.msra.mxu0 %v692
    %725 = vmatpush.msra.mxu0 %v690
    %726 = vmatpush.msra.mxu0 %v688
    %727 = vmatpush.msra.mxu0 %v686
    %728 = vmatpush.msra.mxu0 %v684
    %729 = vmatpush.msra.mxu0 %v682
    %730 = vmatpush.msra.mxu0 %v680
    %731 = vmatpush.msra.mxu0 %v678
    %732 = vmatmul.f32.gmra.mxu0 %v694
    %v733 = vpop.f32.mrf.mxu0
    %v734 = vadd.f32 0.0, %v733
    %735 = vdwg.mxu0
    %v738 = vrot.slane %v734, 7
    %v739 = vsel %vm272, %v714, %v738
    %v741 = vadd.f32 %v676, %v739
    %v742 = vtanh.pop %v741
    %v743 = vmul.f32 %v742, 0.5
    %v744 = vadd.f32 %v743, 0.5
    %v745 = vmul.f32 %v744, %v663
    %747 = vrot.lane.b32.xlu0 %v742, 64
    %v748 = vpop.permute.xlu0 %747
    %v749 = vrot.slane %v748, 1
    %v751 = vmul.f32 %v744, %v749
    %753 = vrot.lane.b32.xlu0 %v751, 64
    %v754 = vpop.permute.xlu0 %753
    %v756 = vadd.f32 %v745, %v754
    %v757 = vtanh.pop %v756
    %v759 = vrot.slane %v744, 1
    %762 = vrot.lane.b32.xlu0 %v757, 64
    %v763 = vpop.permute.xlu0 %762
    %v765 = vmul.f32 %v759, %v763
    %766 = vst.msk [vmem:[#allocation4 + $0x5] sm:$0x1] %vm61, %v765
    %767 = vst.msk [vmem:[#allocation4 + $0x2] sm:$0x1] %vm301, %v765
    %s768 = scalar_lea.vmem [#allocation3], 6
    %v769 = vld [vmem:[%s768] ss:$8 sm:$0x3]
    %v770 = vld [vmem:[#allocation7] sm:$0xff]
    %v771 = vld [vmem:[#allocation7 + $0x8] sm:$0xff]
    %v772 = vld [vmem:[#allocation7 + $0x10] sm:$0xff]
    %v773 = vld [vmem:[#allocation7 + $0x18] sm:$0xff]
    %v774 = vld [vmem:[#allocation7 + $0x20] sm:$0xff]
    %v775 = vld [vmem:[#allocation7 + $0x28] sm:$0xff]
    %v776 = vld [vmem:[#allocation7 + $0x30] sm:$0xff]
    %v777 = vld [vmem:[#allocation7 + $0x38] sm:$0xff]
    %v778 = vld [vmem:[#allocation7 + $0x40] sm:$0xff]
    %v779 = vld [vmem:[#allocation7 + $0x48] sm:$0xff]
    %v780 = vld [vmem:[#allocation7 + $0x50] sm:$0xff]
    %v781 = vld [vmem:[#allocation7 + $0x58] sm:$0xff]
    %v782 = vld [vmem:[#allocation7 + $0x60] sm:$0xff]
    %v783 = vld [vmem:[#allocation7 + $0x68] sm:$0xff]
    %v784 = vld [vmem:[#allocation7 + $0x70] sm:$0xff]
    %v785 = vld [vmem:[#allocation7 + $0x78] sm:$0xff]
    %v787 = vsel %vm225, %v765, 0
    %789 = vmatpush.msra.mxu0 0.0
    %790 = vmatpush.msra.mxu0 0.0
    %791 = vmatpush.msra.mxu0 0.0
    %792 = vmatpush.msra.mxu0 0.0
    %793 = vmatpush.msra.mxu0 0.0
    %794 = vmatpush.msra.mxu0 0.0
    %795 = vmatpush.msra.mxu0 0.0
    %796 = vmatpush.msra.mxu0 0.0
    %797 = vmatpush.msra.mxu0 %v784
    %798 = vmatpush.msra.mxu0 %v782
    %799 = vmatpush.msra.mxu0 %v780
    %800 = vmatpush.msra.mxu0 %v778
    %801 = vmatpush.msra.mxu0 %v776
    %802 = vmatpush.msra.mxu0 %v774
    %803 = vmatpush.msra.mxu0 %v772
    %804 = vmatpush.msra.mxu0 %v770
    %805 = vmatmul.f32.gmra.mxu0 %v787
    %v806 = vpop.f32.mrf.mxu0
    %v807 = vadd.f32 0.0, %v806
    %808 = vdwg.mxu0
    %809 = vmatpush.msra.mxu0 0.0
    %810 = vmatpush.msra.mxu0 0.0
    %811 = vmatpush.msra.mxu0 0.0
    %812 = vmatpush.msra.mxu0 0.0
    %813 = vmatpush.msra.mxu0 0.0
    %814 = vmatpush.msra.mxu0 0.0
    %815 = vmatpush.msra.mxu0 0.0
    %816 = vmatpush.msra.mxu0 0.0
    %817 = vmatpush.msra.mxu0 %v785
    %818 = vmatpush.msra.mxu0 %v783
    %819 = vmatpush.msra.mxu0 %v781
    %820 = vmatpush.msra.mxu0 %v779
    %821 = vmatpush.msra.mxu0 %v777
    %822 = vmatpush.msra.mxu0 %v775
    %823 = vmatpush.msra.mxu0 %v773
    %824 = vmatpush.msra.mxu0 %v771
    %825 = vmatmul.f32.gmra.mxu0 %v787
    %v826 = vpop.f32.mrf.mxu0
    %v827 = vadd.f32 0.0, %v826
    %828 = vdwg.mxu0
    %v831 = vrot.slane %v827, 7
    %v832 = vsel %vm272, %v807, %v831
    %v834 = vadd.f32 %v769, %v832
    %v835 = vtanh.pop %v834
    %v836 = vmul.f32 %v835, 0.5
    %v837 = vadd.f32 %v836, 0.5
    %v838 = vmul.f32 %v837, %v756
    %840 = vrot.lane.b32.xlu0 %v835, 64
    %v841 = vpop.permute.xlu0 %840
    %v842 = vrot.slane %v841, 1
    %v844 = vmul.f32 %v837, %v842
    %846 = vrot.lane.b32.xlu0 %v844, 64
    %v847 = vpop.permute.xlu0 %846
    %v849 = vadd.f32 %v838, %v847
    %v850 = vtanh.pop %v849
    %v852 = vrot.slane %v837, 1
    %855 = vrot.lane.b32.xlu0 %v850, 64
    %v856 = vpop.permute.xlu0 %855
    %v858 = vmul.f32 %v852, %v856
    %859 = vst.msk [vmem:[#allocation4 + $0x6] sm:$0x1] %vm61, %v858
    %860 = vst.msk [vmem:[#allocation4 + $0x1] sm:$0x1] %vm301, %v858
    %s861 = scalar_lea.vmem [#allocation3], 7
    %v862 = vld [vmem:[%s861] ss:$8 sm:$0x3]
    %v863 = vld [vmem:[#allocation7] sm:$0xff]
    %v864 = vld [vmem:[#allocation7 + $0x8] sm:$0xff]
    %v865 = vld [vmem:[#allocation7 + $0x10] sm:$0xff]
    %v866 = vld [vmem:[#allocation7 + $0x18] sm:$0xff]
    %v867 = vld [vmem:[#allocation7 + $0x20] sm:$0xff]
    %v868 = vld [vmem:[#allocation7 + $0x28] sm:$0xff]
    %v869 = vld [vmem:[#allocation7 + $0x30] sm:$0xff]
    %v870 = vld [vmem:[#allocation7 + $0x38] sm:$0xff]
    %v871 = vld [vmem:[#allocation7 + $0x40] sm:$0xff]
    %v872 = vld [vmem:[#allocation7 + $0x48] sm:$0xff]
    %v873 = vld [vmem:[#allocation7 + $0x50] sm:$0xff]
    %v874 = vld [vmem:[#allocation7 + $0x58] sm:$0xff]
    %v875 = vld [vmem:[#allocation7 + $0x60] sm:$0xff]
    %v876 = vld [vmem:[#allocation7 + $0x68] sm:$0xff]
    %v877 = vld [vmem:[#allocation7 + $0x70] sm:$0xff]
    %v878 = vld [vmem:[#allocation7 + $0x78] sm:$0xff]
    %v880 = vsel %vm225, %v858, 0
    %882 = vmatpush.msra.mxu0 0.0
    %883 = vmatpush.msra.mxu0 0.0
    %884 = vmatpush.msra.mxu0 0.0
    %885 = vmatpush.msra.mxu0 0.0
    %886 = vmatpush.msra.mxu0 0.0
    %887 = vmatpush.msra.mxu0 0.0
    %888 = vmatpush.msra.mxu0 0.0
    %889 = vmatpush.msra.mxu0 0.0
    %890 = vmatpush.msra.mxu0 %v877
    %891 = vmatpush.msra.mxu0 %v875
    %892 = vmatpush.msra.mxu0 %v873
    %893 = vmatpush.msra.mxu0 %v871
    %894 = vmatpush.msra.mxu0 %v869
    %895 = vmatpush.msra.mxu0 %v867
    %896 = vmatpush.msra.mxu0 %v865
    %897 = vmatpush.msra.mxu0 %v863
    %898 = vmatmul.f32.gmra.mxu0 %v880
    %v899 = vpop.f32.mrf.mxu0
    %v900 = vadd.f32 0.0, %v899
    %901 = vdwg.mxu0
    %902 = vmatpush.msra.mxu0 0.0
    %903 = vmatpush.msra.mxu0 0.0
    %904 = vmatpush.msra.mxu0 0.0
    %905 = vmatpush.msra.mxu0 0.0
    %906 = vmatpush.msra.mxu0 0.0
    %907 = vmatpush.msra.mxu0 0.0
    %908 = vmatpush.msra.mxu0 0.0
    %909 = vmatpush.msra.mxu0 0.0
    %910 = vmatpush.msra.mxu0 %v878
    %911 = vmatpush.msra.mxu0 %v876
    %912 = vmatpush.msra.mxu0 %v874
    %913 = vmatpush.msra.mxu0 %v872
    %914 = vmatpush.msra.mxu0 %v870
    %915 = vmatpush.msra.mxu0 %v868
    %916 = vmatpush.msra.mxu0 %v866
    %917 = vmatpush.msra.mxu0 %v864
    %918 = vmatmul.f32.gmra.mxu0 %v880
    %v919 = vpop.f32.mrf.mxu0
    %v920 = vadd.f32 0.0, %v919
    %921 = vdwg.mxu0
    %v924 = vrot.slane %v920, 7
    %v925 = vsel %vm272, %v900, %v924
    %v927 = vadd.f32 %v862, %v925
    %v928 = vtanh.pop %v927
    %v929 = vmul.f32 %v928, 0.5
    %v930 = vadd.f32 %v929, 0.5
    %v931 = vmul.f32 %v930, %v849
    %933 = vrot.lane.b32.xlu0 %v928, 64
    %v934 = vpop.permute.xlu0 %933
    %v935 = vrot.slane %v934, 1
    %v937 = vmul.f32 %v930, %v935
    %939 = vrot.lane.b32.xlu0 %v937, 64
    %v940 = vpop.permute.xlu0 %939
    %v942 = vadd.f32 %v931, %v940
    %v943 = vtanh.pop %v942
    %v945 = vrot.slane %v930, 1
    %948 = vrot.lane.b32.xlu0 %v943, 64
    %v949 = vpop.permute.xlu0 %948
    %v951 = vmul.f32 %v945, %v949
    %952 = vst.msk [vmem:[#allocation4 + $0x7] sm:$0x1] %vm61, %v951
    %953 = vst.msk [vmem:[#allocation4] sm:$0x1] %vm301, %v951
    %v954 = vld [vmem:[#allocation4] sm:$0xff]
    %v955 = vld [vmem:[%s5] sm:$0xff]
    %v956 = vld [vmem:[%s5 + $0x8] sm:$0xff]
    %v957 = vld [vmem:[%s5 + $0x10] sm:$0xff]
    %v958 = vld [vmem:[%s5 + $0x18] sm:$0xff]
    %v959 = vld [vmem:[%s5 + $0x20] sm:$0xff]
    %v960 = vld [vmem:[%s5 + $0x28] sm:$0xff]
    %v961 = vld [vmem:[%s5 + $0x30] sm:$0xff]
    %v962 = vld [vmem:[%s5 + $0x38] sm:$0xff]
    %v963 = vld [vmem:[%s6] sm:$0x1]
    %v965 = vperm.slane %v963, 0
    %v968 = vsel %vm225, %v954, 0
    %970 = vmatpush.msra.mxu0 0.0
    %971 = vmatpush.msra.mxu0 0.0
    %972 = vmatpush.msra.mxu0 0.0
    %973 = vmatpush.msra.mxu0 0.0
    %974 = vmatpush.msra.mxu0 0.0
    %975 = vmatpush.msra.mxu0 0.0
    %976 = vmatpush.msra.mxu0 0.0
    %977 = vmatpush.msra.mxu0 0.0
    %978 = vmatpush.msra.mxu0 %v962
    %979 = vmatpush.msra.mxu0 %v961
    %980 = vmatpush.msra.mxu0 %v960
    %981 = vmatpush.msra.mxu0 %v959
    %982 = vmatpush.msra.mxu0 %v958
    %983 = vmatpush.msra.mxu0 %v957
    %984 = vmatpush.msra.mxu0 %v956
    %985 = vmatpush.msra.mxu0 %v955
    %986 = vmatmul.f32.gmra.mxu0 %v968
    %v987 = vpop.f32.mrf.mxu0
    %v988 = vadd.f32 %v965, %v987
    %989 = vdwg.mxu0
    %vm990 = vcmask 64512
    %991 = vst.msk [vmem:[#allocation10] sm:$0xff] %vm990, %v988
    // Predicated region
    $region30: #{tpu_custom_call.1} parent=1 // pred_check
      _
    $region31: #{tpu_custom_call.1} parent=1 // pred_check_branch
      %993 = sbr.rel (0) target = $region33
    $region32: #{tpu_custom_call.1} parent=1 // pred_region
      %995 = vsyncadd [#allocation9], 0
      %s997 = sshll.u32 [#allocation10], 4
      %s998 = int_to_ptr.vmem [resolvable:$true] %s997
      %s999 = sshll.u32 %s7, 4
      %s1000 = int_to_ptr.hbm [resolvable:$true] %s999
      %1002 = dma.vmem_to_hbm [thread:$0]  %s998, 128, %s1000, [#allocation9]
    $region33: #{tpu_custom_call.1} parent=1 // pred_fallthru
      _
    // Predicated region
    $region34: #{tpu_custom_call.1} parent=1 // pred_check
      _
    $region35: #{tpu_custom_call.1} parent=1 // pred_check_branch
      %1004 = sbr.rel (0) target = $region37
    $region36: #{tpu_custom_call.1} parent=1 // pred_region
      %1006 = dma.done [#allocation9], 128
    $region37: #{tpu_custom_call.1} parent=1 // pred_fallthru
      _
    %1007 = vsyncpa [#allocation8], 1
    %1008 = vsyncpa [#allocation9], 1

</llo_original>
